<compile_context>
chip_gen: v5e
topology: v5e:2x2
jax: 0.10.0
libtpu: 0.0.40
codegen_flags: <defaults>
</compile_context>

<pallas_src>
from functools import partial

import jax
import jax.numpy as jnp
from jax import lax
from jax.experimental import pallas as pl
from jax.experimental.pallas import tpu as pltpu


# ------------------------------ kernel body --------------------------------- #

def _attn_body(x_ref, ctx_ref, wq_ref, wkv_ref, wo_ref, bo_ref, o_ref,
               q_s, kv_s, hout_s, *, heads, dim_head, tq):
    """Fused projections + multi-head attention + output projection.

    x_ref:   (Nq, C)         query source (this batch element)
    ctx_ref: (Nk, Ck)        key/value source (== x_ref for self-attention)
    wq_ref:  (C, inner)      q weight with softmax scale pre-folded
    wkv_ref: (Ck, 2*inner)   fused [k | v] weight
    wo_ref:  (inner, c_pad)  output projection (lane-padded to 128)
    bo_ref:  (1, c_pad)      output bias
    o_ref:   (tq, c_pad)     output block for this q-tile
    q_s:     (tq, inner)     VMEM scratch
    kv_s:    (Nk, 2*inner)   VMEM scratch
    hout_s:  (tq, inner)     VMEM scratch (concatenated head outputs)
    """
    inner = heads * dim_head
    mxu_dtype = q_s.dtype
    i = pl.program_id(1)
    row0 = pl.multiple_of(i * tq, tq)

    # Projections.  Results go straight into VMEM scratch so the per-head slices
    # below are cheap ref loads rather than value relayouts.  The softmax scale is
    # already folded into wq, so no in-kernel VPU multiply is needed.
    kv_s[...] = jnp.dot(ctx_ref[...], wkv_ref[...],
                        preferred_element_type=jnp.float32).astype(mxu_dtype)
    q_s[...] = jnp.dot(x_ref[pl.ds(row0, tq), :], wq_ref[...],
                       preferred_element_type=jnp.float32).astype(mxu_dtype)

    # Per-head attention.  Static Python loop, but nothing is carried across
    # iterations (each head reads scratch, writes its own lane slice of hout_s).
    for h in range(heads):
        lo = h * dim_head
        qh = q_s[:, lo:lo + dim_head]                      # (tq, d)
        kh = kv_s[:, lo:lo + dim_head]                     # (Nk, d)
        vh = kv_s[:, inner + lo:inner + lo + dim_head]     # (Nk, d)
        # (tq, Nk) scores; contract last dims directly (no explicit k transpose).
        sim = lax.dot_general(qh, kh, (((1,), (1,)), ((), ())),
                              preferred_element_type=jnp.float32)
        sim = sim - jnp.max(sim, axis=-1, keepdims=True)   # stable softmax
        p = jnp.exp(sim)
        p = p * pl.reciprocal(jnp.sum(p, axis=-1, keepdims=True), approx=False)
        oh = jnp.dot(p.astype(mxu_dtype), vh,
                     preferred_element_type=jnp.float32)   # (tq, d)
        hout_s[:, lo:lo + dim_head] = oh.astype(mxu_dtype)

    # ONE big output-projection GEMM over the full inner dimension.
    out = jnp.dot(hout_s[...], wo_ref[...], preferred_element_type=jnp.float32)
    o_ref[...] = (out + bo_ref[...].astype(jnp.float32)).astype(o_ref.dtype)


def _self_attn_kernel(x_ref, wq_ref, wkv_ref, wo_ref, bo_ref, o_ref,
                      q_s, kv_s, hout_s, *, heads, dim_head, tq):
    # context is None: x is both the query and the key/value source, and is only
    # read from HBM once per grid step.
    _attn_body(x_ref, x_ref, wq_ref, wkv_ref, wo_ref, bo_ref, o_ref,
               q_s, kv_s, hout_s, heads=heads, dim_head=dim_head, tq=tq)


def _cross_attn_kernel(x_ref, ctx_ref, wq_ref, wkv_ref, wo_ref, bo_ref, o_ref,
                       q_s, kv_s, hout_s, *, heads, dim_head, tq):
    _attn_body(x_ref, ctx_ref, wq_ref, wkv_ref, wo_ref, bo_ref, o_ref,
               q_s, kv_s, hout_s, heads=heads, dim_head=dim_head, tq=tq)


# --------------------------- parameter preparation -------------------------- #

def prepare_cross_attention_params(params, *, heads, dim_head, lane_multiple=128):
    """One-time parameter prep (do NOT call per forward):
       * fold the softmax scale dim_head**-0.5 into the q projection columns,
       * fuse k|v into a single (Ck, 2*inner) weight,
       * zero-pad the output projection / bias to a lane-dense multiple of 128.
    For v6e/v7x, cast these (and the activations) to bf16 here if the accuracy
    budget allows — the kernel uses the input dtype as the MXU operand dtype."""
    inner = heads * dim_head
    scale = dim_head ** (-0.5)
    wq = (params["wq"] * scale).astype(params["wq"].dtype)
    wkv = jnp.concatenate([params["wk"], params["wv"]], axis=1)
    wo = params["wo"]
    bo = params["bo"].reshape(1, -1)
    c_out = wo.shape[1]
    c_pad = ((c_out + lane_multiple - 1) // lane_multiple) * lane_multiple
    if c_pad != c_out:
        wo = jnp.pad(wo, ((0, 0), (0, c_pad - c_out)))
        bo = jnp.pad(bo, ((0, 0), (0, c_pad - c_out)))
    assert wq.shape[1] == inner and wkv.shape[1] == 2 * inner and wo.shape[0] == inner
    return {"wq": wq, "wkv": wkv, "wo": wo, "bo": bo, "c_out": c_out}


# ------------------------------ forward wrapper ------------------------------ #

def cross_attention_forward(x, prepared, *, heads, dim_head, context=None):
    """Pallas implementation of CrossAttention.forward(x, context, mask=None)."""
    B, Nq, C = x.shape
    inner = heads * dim_head
    wq, wkv, wo, bo = prepared["wq"], prepared["wkv"], prepared["wo"], prepared["bo"]
    c_out = prepared["c_out"]
    c_pad = wo.shape[1]

    ctx = context
    if ctx is None:
        Nk, Ck = Nq, C
    else:
        _, Nk, Ck = ctx.shape

    # q-row tile: full sequence unless Nq is a large multiple of 128 (then tile it
    # so v7x megacore has more parallel grid points and VMEM stays bounded).
    tq = 128 if (Nq > 128 and Nq % 128 == 0) else Nq
    n_qt = Nq // tq
    grid = (B, n_qt)

    batch_only = lambda b, i: (b, 0, 0)   # resident across q-tiles
    out_idx = lambda b, i: (b, i, 0)
    w_idx = lambda b, i: (0, 0)           # grid-invariant weights

    x_spec = pl.BlockSpec((pl.Squeezed(), Nq, C), batch_only)
    out_spec = pl.BlockSpec((pl.Squeezed(), tq, c_pad), out_idx)
    if ctx is None:
        kern = partial(_self_attn_kernel, heads=heads, dim_head=dim_head, tq=tq)
        act_specs = [x_spec]
        operands = (x, wq, wkv, wo, bo)
    else:
        kern = partial(_cross_attn_kernel, heads=heads, dim_head=dim_head, tq=tq)
        act_specs = [x_spec, pl.BlockSpec((pl.Squeezed(), Nk, Ck), batch_only)]
        operands = (x, ctx, wq, wkv, wo, bo)

    wshapes = [(C, inner), (Ck, 2 * inner), (inner, c_pad), (1, c_pad)]

    scratch = [
        pltpu.VMEM((tq, inner), x.dtype),        # q tile
        pltpu.VMEM((Nk, 2 * inner), x.dtype),    # fused k|v
        pltpu.VMEM((tq, inner), x.dtype),        # concatenated head outputs
    ]

    # Explicit VMEM budget: activations / output double-buffered by the pipeline,
    # weights (ideally) single-buffered, plus scratch and per-head f32 temporaries.
    act_item = jnp.dtype(x.dtype).itemsize
    est = 2 * Nq * C * act_item
    if ctx is not None:
        est += 2 * Nk * Ck * jnp.dtype(ctx.dtype).itemsize
    est += 2 * tq * c_pad * act_item                                   # output block
    est += sum(int(a.size) * a.dtype.itemsize for a in (wq, wkv, wo, bo))
    est += (2 * tq * inner + Nk * 2 * inner) * act_item                # scratch
    est += 4 * tq * Nk * 4                                             # score temporaries
    vmem_limit = int(min(64 * 1024 * 1024, max(8 * 1024 * 1024, 2 * est)))

    cparams = pltpu.CompilerParams(
        dimension_semantics=("parallel", "parallel"),
        vmem_limit_bytes=vmem_limit,
    )

    def _run(single_buffer_weights):
        extra = {"pipeline_mode": pl.Buffered(1)} if single_buffer_weights else {}
        weight_specs = [pl.BlockSpec(s, w_idx, **extra) for s in wshapes]
        return pl.pallas_call(
            kern,
            out_shape=jax.ShapeDtypeStruct((B, Nq, c_pad), x.dtype),
            grid=grid,
            in_specs=act_specs + weight_specs,
            out_specs=out_spec,
            scratch_shapes=scratch,
            compiler_params=cparams,
        )(*operands)

    try:
        # Single-buffer the grid-invariant weights (halves their VMEM footprint).
        out = _run(True)
    except Exception:  # compatibility fallback if pipeline_mode/Buffered(1) is rejected
        out = _run(False)

    if c_pad != c_out:
        out = out[..., :c_out]
    return out


# --------------------------- reference (plain JAX) -------------------------- #

def reference_forward(x, params, *, heads, dim_head, context=None):
    B, Nq, Cq = x.shape
    ctx = x if context is None else context
    _, Nk, _ = ctx.shape
    scale = dim_head ** (-0.5)
    q = x @ params["wq"]
    k = ctx @ params["wk"]
    v = ctx @ params["wv"]

    def split(t, n):
        return (t.reshape(B, n, heads, dim_head)
                 .transpose(0, 2, 1, 3)
                 .reshape(B * heads, n, dim_head))

    qh, kh, vh = split(q, Nq), split(k, Nk), split(v, Nk)
    sim = jnp.einsum("bid,bjd->bij", qh, kh) * scale
    attn = jax.nn.softmax(sim, axis=-1)
    out = jnp.einsum("bij,bjd->bid", attn, vh)
    out = (out.reshape(B, heads, Nq, dim_head)
              .transpose(0, 2, 1, 3)
              .reshape(B, Nq, heads * dim_head))
    return out @ params["wo"] + params["bo"]


# ---------------------------------- main ------------------------------------ #

if __name__ == "__main__":
    B, N = 2, 16                    # batch, sequence length
    query_dim = 32                  # channels of x
    heads, dim_head = 2, 16         # inner_dim = 32
    inner_dim = heads * dim_head
    context_dim = query_dim         # default(context_dim, query_dim)
    Nk_ctx = 8                      # sequence length of the explicit-context test

    key = jax.random.PRNGKey(0)
    kx, kq, kk, kv, ko, kb, kc = jax.random.split(key, 7)

    x = jax.random.normal(kx, (B, N, query_dim), dtype=jnp.float32)
    ctx = jax.random.normal(kc, (B, Nk_ctx, context_dim), dtype=jnp.float32)

    # Deterministic synthetic weights (stored pre-transposed: (in, out)).
    params = {
        "wq": 0.05 * jax.random.normal(kq, (query_dim, inner_dim), jnp.float32),
        "wk": 0.05 * jax.random.normal(kk, (context_dim, inner_dim), jnp.float32),
        "wv": 0.05 * jax.random.normal(kv, (context_dim, inner_dim), jnp.float32),
        "wo": 0.05 * jax.random.normal(ko, (inner_dim, query_dim), jnp.float32),
        "bo": 0.05 * jax.random.normal(kb, (query_dim,), jnp.float32),
    }
    prepared = prepare_cross_attention_params(params, heads=heads, dim_head=dim_head)

    # Self-attention path (context=None), as in the default forward.
    y = cross_attention_forward(x, prepared, heads=heads, dim_head=dim_head)
    y = jax.block_until_ready(y)
    y_ref = reference_forward(x, params, heads=heads, dim_head=dim_head)
    assert y.shape == (B, N, query_dim)
    assert jnp.allclose(y, y_ref, atol=1e-3, rtol=1e-3), "self-attn mismatch"

    # Cross-attention path (explicit context).
    yc = cross_attention_forward(x, prepared, heads=heads, dim_head=dim_head,
                                 context=ctx)
    yc = jax.block_until_ready(yc)
    yc_ref = reference_forward(x, params, heads=heads, dim_head=dim_head,
                               context=ctx)
    assert yc.shape == (B, N, query_dim)
    assert jnp.allclose(yc, yc_ref, atol=1e-3, rtol=1e-3), "cross-attn mismatch"

    print("KERNEL_OK")
</pallas_src>

<mosaic_0001>
module attributes {stable_mosaic.version = 11 : i64} {
  func.func @_self_attn_kernel(%arg0: i32, %arg1: i32, %arg2: memref<1x16x32xf32, #tpu.memory_space<vmem>>, %arg3: memref<32x32xf32, #tpu.memory_space<vmem>>, %arg4: memref<32x64xf32, #tpu.memory_space<vmem>>, %arg5: memref<32x128xf32, #tpu.memory_space<vmem>>, %arg6: memref<1x128xf32, #tpu.memory_space<vmem>>, %arg7: memref<1x16x128xf32, #tpu.memory_space<vmem>>, %arg8: memref<16x32xf32, #tpu.memory_space<vmem>>, %arg9: memref<16x64xf32, #tpu.memory_space<vmem>>, %arg10: memref<16x32xf32, #tpu.memory_space<vmem>>) attributes {dimension_semantics = [#tpu.dimension_semantics<parallel>, #tpu.dimension_semantics<parallel>], iteration_bounds = array<i64: 2, 1>, scalar_prefetch = 0 : i64, scratch_operands = 3 : i64, tpu.core_type = #tpu.core_type<tc>, window_params = [{transform_indices = @transform_0, window_bounds = array<i64: 1, 16, 32>}, {pipeline_mode = #tpu.pipeline_mode<synchronous>, transform_indices = @transform_1, window_bounds = array<i64: 32, 32>}, {pipeline_mode = #tpu.pipeline_mode<synchronous>, transform_indices = @transform_2, window_bounds = array<i64: 32, 64>}, {pipeline_mode = #tpu.pipeline_mode<synchronous>, transform_indices = @transform_3, window_bounds = array<i64: 32, 128>}, {pipeline_mode = #tpu.pipeline_mode<synchronous>, transform_indices = @transform_4, window_bounds = array<i64: 1, 128>}, {transform_indices = @transform_5, window_bounds = array<i64: 1, 16, 128>}]} {
    %c16_i32 = arith.constant 16 : i32
    %0 = arith.muli %arg1, %c16_i32 : i32
    %1 = tpu.assume_multiple %0, 16 : i32
    %c0 = arith.constant 0 : index
    %c0_0 = arith.constant 0 : index
    %c0_1 = arith.constant 0 : index
    %2 = vector.load %arg2[%c0, %c0_0, %c0_1] : memref<1x16x32xf32, #tpu.memory_space<vmem>>, vector<1x16x32xf32>
    %3 = vector.shape_cast %2 : vector<1x16x32xf32> to vector<16x32xf32>
    %c0_2 = arith.constant 0 : index
    %c0_3 = arith.constant 0 : index
    %4 = vector.load %arg4[%c0_2, %c0_3] : memref<32x64xf32, #tpu.memory_space<vmem>>, vector<32x64xf32>
    %cst = arith.constant dense<0.000000e+00> : vector<16x64xf32>
    %5 = tpu.matmul %3, %4, %cst {dimension_numbers = #tpu.dot_dimension_numbers<[1], [0], [0], [1], [0, 0, 1, 1], [], []>} : vector<16x32xf32>, vector<32x64xf32>, vector<16x64xf32> -> vector<16x64xf32>
    %c0_4 = arith.constant 0 : index
    %c0_5 = arith.constant 0 : index
    %6 = vector.load %arg9[%c0_4, %c0_5] : memref<16x64xf32, #tpu.memory_space<vmem>>, vector<16x64xf32>
    tpu.vector_store %arg9[%c0_4, %c0_5], %5 {strides = array<i32>} : memref<16x64xf32, #tpu.memory_space<vmem>>, vector<16x64xf32>,
    %c0_6 = arith.constant 0 : index
    %7 = arith.index_cast %1 : i32 to index
    %c0_7 = arith.constant 0 : index
    %8 = vector.load %arg2[%c0_6, %7, %c0_7] : memref<1x16x32xf32, #tpu.memory_space<vmem>>, vector<1x16x32xf32>
    %9 = vector.shape_cast %8 : vector<1x16x32xf32> to vector<16x32xf32>
    %c0_8 = arith.constant 0 : index
    %c0_9 = arith.constant 0 : index
    %10 = vector.load %arg3[%c0_8, %c0_9] : memref<32x32xf32, #tpu.memory_space<vmem>>, vector<32x32xf32>
    %cst_10 = arith.constant dense<0.000000e+00> : vector<16x32xf32>
    %11 = tpu.matmul %9, %10, %cst_10 {dimension_numbers = #tpu.dot_dimension_numbers<[1], [0], [0], [1], [0, 0, 1, 1], [], []>} : vector<16x32xf32>, vector<32x32xf32>, vector<16x32xf32> -> vector<16x32xf32>
    %c0_11 = arith.constant 0 : index
    %c0_12 = arith.constant 0 : index
    %12 = vector.load %arg8[%c0_11, %c0_12] : memref<16x32xf32, #tpu.memory_space<vmem>>, vector<16x32xf32>
    tpu.vector_store %arg8[%c0_11, %c0_12], %11 {strides = array<i32>} : memref<16x32xf32, #tpu.memory_space<vmem>>, vector<16x32xf32>,
    %c0_13 = arith.constant 0 : index
    %c0_14 = arith.constant 0 : index
    %13 = vector.load %arg8[%c0_13, %c0_14] : memref<16x32xf32, #tpu.memory_space<vmem>>, vector<16x16xf32>
    %c0_15 = arith.constant 0 : index
    %c0_16 = arith.constant 0 : index
    %14 = vector.load %arg9[%c0_15, %c0_16] : memref<16x64xf32, #tpu.memory_space<vmem>>, vector<16x16xf32>
    %c0_17 = arith.constant 0 : index
    %c32 = arith.constant 32 : index
    %15 = vector.load %arg9[%c0_17, %c32] : memref<16x64xf32, #tpu.memory_space<vmem>>, vector<16x16xf32>
    %cst_18 = arith.constant dense<0.000000e+00> : vector<16x16xf32>
    %16 = tpu.matmul %13, %14, %cst_18 {dimension_numbers = #tpu.dot_dimension_numbers<[1], [1], [0], [0], [0, 0, 1, 0], [], []>} : vector<16x16xf32>, vector<16x16xf32>, vector<16x16xf32> -> vector<16x16xf32>
    %cst_19 = arith.constant dense<0xFF800000> : vector<16xf32>
    %17 = vector.multi_reduction <maximumf>, %16, %cst_19 [1] : vector<16x16xf32> to vector<16xf32>
    %18 = vector.shape_cast %17 : vector<16xf32> to vector<16x1xf32>
    %19 = vector.broadcast %18 : vector<16x1xf32> to vector<16x16xf32>
    %20 = arith.subf %16, %19 : vector<16x16xf32>
    %21 = math.exp %20 : vector<16x16xf32>
    %cst_20 = arith.constant dense<0.000000e+00> : vector<16xf32>
    %22 = vector.multi_reduction <add>, %21, %cst_20 [1] : vector<16x16xf32> to vector<16xf32>
    %23 = vector.shape_cast %22 : vector<16xf32> to vector<16x1xf32>
    %24 = tpu.reciprocal %23 : vector<16x1xf32> -> vector<16x1xf32>
    %25 = vector.broadcast %24 : vector<16x1xf32> to vector<16x16xf32>
    %26 = arith.mulf %21, %25 : vector<16x16xf32>
    %cst_21 = arith.constant dense<0.000000e+00> : vector<16x16xf32>
    %27 = tpu.matmul %26, %15, %cst_21 {dimension_numbers = #tpu.dot_dimension_numbers<[1], [0], [0], [1], [0, 0, 1, 1], [], []>} : vector<16x16xf32>, vector<16x16xf32>, vector<16x16xf32> -> vector<16x16xf32>
    %c0_22 = arith.constant 0 : index
    %c0_23 = arith.constant 0 : index
    %28 = vector.load %arg10[%c0_22, %c0_23] : memref<16x32xf32, #tpu.memory_space<vmem>>, vector<16x16xf32>
    tpu.vector_store %arg10[%c0_22, %c0_23], %27 {strides = array<i32>} : memref<16x32xf32, #tpu.memory_space<vmem>>, vector<16x16xf32>,
    %c0_24 = arith.constant 0 : index
    %c16 = arith.constant 16 : index
    %29 = vector.load %arg8[%c0_24, %c16] : memref<16x32xf32, #tpu.memory_space<vmem>>, vector<16x16xf32>
    %c0_25 = arith.constant 0 : index
    %c16_26 = arith.constant 16 : index
    %30 = vector.load %arg9[%c0_25, %c16_26] : memref<16x64xf32, #tpu.memory_space<vmem>>, vector<16x16xf32>
    %c0_27 = arith.constant 0 : index
    %c48 = arith.constant 48 : index
    %31 = vector.load %arg9[%c0_27, %c48] : memref<16x64xf32, #tpu.memory_space<vmem>>, vector<16x16xf32>
    %cst_28 = arith.constant dense<0.000000e+00> : vector<16x16xf32>
    %32 = tpu.matmul %29, %30, %cst_28 {dimension_numbers = #tpu.dot_dimension_numbers<[1], [1], [0], [0], [0, 0, 1, 0], [], []>} : vector<16x16xf32>, vector<16x16xf32>, vector<16x16xf32> -> vector<16x16xf32>
    %cst_29 = arith.constant dense<0xFF800000> : vector<16xf32>
    %33 = vector.multi_reduction <maximumf>, %32, %cst_29 [1] : vector<16x16xf32> to vector<16xf32>
    %34 = vector.shape_cast %33 : vector<16xf32> to vector<16x1xf32>
    %35 = vector.broadcast %34 : vector<16x1xf32> to vector<16x16xf32>
    %36 = arith.subf %32, %35 : vector<16x16xf32>
    %37 = math.exp %36 : vector<16x16xf32>
    %cst_30 = arith.constant dense<0.000000e+00> : vector<16xf32>
    %38 = vector.multi_reduction <add>, %37, %cst_30 [1] : vector<16x16xf32> to vector<16xf32>
    %39 = vector.shape_cast %38 : vector<16xf32> to vector<16x1xf32>
    %40 = tpu.reciprocal %39 : vector<16x1xf32> -> vector<16x1xf32>
    %41 = vector.broadcast %40 : vector<16x1xf32> to vector<16x16xf32>
    %42 = arith.mulf %37, %41 : vector<16x16xf32>
    %cst_31 = arith.constant dense<0.000000e+00> : vector<16x16xf32>
    %43 = tpu.matmul %42, %31, %cst_31 {dimension_numbers = #tpu.dot_dimension_numbers<[1], [0], [0], [1], [0, 0, 1, 1], [], []>} : vector<16x16xf32>, vector<16x16xf32>, vector<16x16xf32> -> vector<16x16xf32>
    %c0_32 = arith.constant 0 : index
    %c16_33 = arith.constant 16 : index
    %44 = vector.load %arg10[%c0_32, %c16_33] : memref<16x32xf32, #tpu.memory_space<vmem>>, vector<16x16xf32>
    tpu.vector_store %arg10[%c0_32, %c16_33], %43 {strides = array<i32>} : memref<16x32xf32, #tpu.memory_space<vmem>>, vector<16x16xf32>,
    %c0_34 = arith.constant 0 : index
    %c0_35 = arith.constant 0 : index
    %45 = vector.load %arg10[%c0_34, %c0_35] : memref<16x32xf32, #tpu.memory_space<vmem>>, vector<16x32xf32>
    %c0_36 = arith.constant 0 : index
    %c0_37 = arith.constant 0 : index
    %46 = vector.load %arg5[%c0_36, %c0_37] : memref<32x128xf32, #tpu.memory_space<vmem>>, vector<32x128xf32>
    %cst_38 = arith.constant dense<0.000000e+00> : vector<16x128xf32>
    %47 = tpu.matmul %45, %46, %cst_38 {dimension_numbers = #tpu.dot_dimension_numbers<[1], [0], [0], [1], [0, 0, 1, 1], [], []>} : vector<16x32xf32>, vector<32x128xf32>, vector<16x128xf32> -> vector<16x128xf32>
    %c0_39 = arith.constant 0 : index
    %c0_40 = arith.constant 0 : index
    %48 = vector.load %arg6[%c0_39, %c0_40] : memref<1x128xf32, #tpu.memory_space<vmem>>, vector<1x128xf32>
    %49 = vector.broadcast %48 : vector<1x128xf32> to vector<16x128xf32>
    %50 = arith.addf %47, %49 : vector<16x128xf32>
    %c0_41 = arith.constant 0 : index
    %c0_42 = arith.constant 0 : index
    %c0_43 = arith.constant 0 : index
    %51 = vector.load %arg7[%c0_41, %c0_42, %c0_43] : memref<1x16x128xf32, #tpu.memory_space<vmem>>, vector<1x16x128xf32>
    %52 = vector.shape_cast %51 : vector<1x16x128xf32> to vector<16x128xf32>
    %53 = vector.shape_cast %50 : vector<16x128xf32> to vector<1x16x128xf32>
    tpu.vector_store %arg7[%c0_41, %c0_42, %c0_43], %53 {strides = array<i32>} : memref<1x16x128xf32, #tpu.memory_space<vmem>>, vector<1x16x128xf32>,
    return
  }
  func.func @transform_0(%arg0: i32, %arg1: i32) -> (i32, i32, i32) {
    %c0_i32 = arith.constant 0 : i32
    %c0_i32_0 = arith.constant 0 : i32
    %c0_i32_1 = arith.constant 0 : i32
    return %arg0, %c0_i32, %c0_i32_0 : i32, i32, i32
  }
  func.func @transform_1(%arg0: i32, %arg1: i32) -> (i32, i32) {
    %c0_i32 = arith.constant 0 : i32
    %c0_i32_0 = arith.constant 0 : i32
    %c0_i32_1 = arith.constant 0 : i32
    return %c0_i32, %c0_i32_0 : i32, i32
  }
  func.func @transform_2(%arg0: i32, %arg1: i32) -> (i32, i32) {
    %c0_i32 = arith.constant 0 : i32
    %c0_i32_0 = arith.constant 0 : i32
    %c0_i32_1 = arith.constant 0 : i32
    return %c0_i32, %c0_i32_0 : i32, i32
  }
  func.func @transform_3(%arg0: i32, %arg1: i32) -> (i32, i32) {
    %c0_i32 = arith.constant 0 : i32
    %c0_i32_0 = arith.constant 0 : i32
    %c0_i32_1 = arith.constant 0 : i32
    return %c0_i32, %c0_i32_0 : i32, i32
  }
  func.func @transform_4(%arg0: i32, %arg1: i32) -> (i32, i32) {
    %c0_i32 = arith.constant 0 : i32
    %c0_i32_0 = arith.constant 0 : i32
    %c0_i32_1 = arith.constant 0 : i32
    return %c0_i32, %c0_i32_0 : i32, i32
  }
  func.func @transform_5(%arg0: i32, %arg1: i32) -> (i32, i32, i32) {
    %c0_i32 = arith.constant 0 : i32
    %c0_i32_0 = arith.constant 0 : i32
    return %arg0, %arg1, %c0_i32 : i32, i32, i32
  }
}

module attributes {stable_mosaic.version = 11 : i64} {
  func.func @_self_attn_kernel(%arg0: i32, %arg1: i32, %arg2: memref<1x16x32xf32, #tpu.memory_space<vmem>>, %arg3: memref<32x32xf32, #tpu.memory_space<vmem>>, %arg4: memref<32x64xf32, #tpu.memory_space<vmem>>, %arg5: memref<32x128xf32, #tpu.memory_space<vmem>>, %arg6: memref<1x128xf32, #tpu.memory_space<vmem>>, %arg7: memref<1x16x128xf32, #tpu.memory_space<vmem>>, %arg8: memref<16x32xf32, #tpu.memory_space<vmem>>, %arg9: memref<16x64xf32, #tpu.memory_space<vmem>>, %arg10: memref<16x32xf32, #tpu.memory_space<vmem>>) attributes {dimension_semantics = [#tpu.dimension_semantics<parallel>, #tpu.dimension_semantics<parallel>], iteration_bounds = array<i64: 2, 1>, scalar_prefetch = 0 : i64, scratch_operands = 3 : i64, tpu.core_type = #tpu.core_type<tc>, window_params = [{transform_indices = @transform_0, window_bounds = array<i64: 1, 16, 32>}, {pipeline_mode = #tpu.pipeline_mode<synchronous>, transform_indices = @transform_1, window_bounds = array<i64: 32, 32>}, {pipeline_mode = #tpu.pipeline_mode<synchronous>, transform_indices = @transform_2, window_bounds = array<i64: 32, 64>}, {pipeline_mode = #tpu.pipeline_mode<synchronous>, transform_indices = @transform_3, window_bounds = array<i64: 32, 128>}, {pipeline_mode = #tpu.pipeline_mode<synchronous>, transform_indices = @transform_4, window_bounds = array<i64: 1, 128>}, {transform_indices = @transform_5, window_bounds = array<i64: 1, 16, 128>}]} {
    %c16_i32 = arith.constant 16 : i32
    %0 = arith.muli %arg1, %c16_i32 : i32
    %1 = tpu.assume_multiple %0, 16 : i32
    %c0 = arith.constant 0 : index
    %c0_0 = arith.constant 0 : index
    %c0_1 = arith.constant 0 : index
    %2 = vector.load %arg2[%c0, %c0_0, %c0_1] : memref<1x16x32xf32, #tpu.memory_space<vmem>>, vector<1x16x32xf32>
    %3 = vector.shape_cast %2 : vector<1x16x32xf32> to vector<16x32xf32>
    %c0_2 = arith.constant 0 : index
    %c0_3 = arith.constant 0 : index
    %4 = vector.load %arg4[%c0_2, %c0_3] : memref<32x64xf32, #tpu.memory_space<vmem>>, vector<32x64xf32>
    %cst = arith.constant dense<0.000000e+00> : vector<16x64xf32>
    %5 = tpu.matmul %3, %4, %cst {dimension_numbers = #tpu.dot_dimension_numbers<[1], [0], [0], [1], [0, 0, 1, 1], [], []>} : vector<16x32xf32>, vector<32x64xf32>, vector<16x64xf32> -> vector<16x64xf32>
    %c0_4 = arith.constant 0 : index
    %c0_5 = arith.constant 0 : index
    %6 = vector.load %arg9[%c0_4, %c0_5] : memref<16x64xf32, #tpu.memory_space<vmem>>, vector<16x64xf32>
    tpu.vector_store %arg9[%c0_4, %c0_5], %5 {strides = array<i32>} : memref<16x64xf32, #tpu.memory_space<vmem>>, vector<16x64xf32>,
    %c0_6 = arith.constant 0 : index
    %7 = arith.index_cast %1 : i32 to index
    %c0_7 = arith.constant 0 : index
    %8 = vector.load %arg2[%c0_6, %7, %c0_7] : memref<1x16x32xf32, #tpu.memory_space<vmem>>, vector<1x16x32xf32>
    %9 = vector.shape_cast %8 : vector<1x16x32xf32> to vector<16x32xf32>
    %c0_8 = arith.constant 0 : index
    %c0_9 = arith.constant 0 : index
    %10 = vector.load %arg3[%c0_8, %c0_9] : memref<32x32xf32, #tpu.memory_space<vmem>>, vector<32x32xf32>
    %cst_10 = arith.constant dense<0.000000e+00> : vector<16x32xf32>
    %11 = tpu.matmul %9, %10, %cst_10 {dimension_numbers = #tpu.dot_dimension_numbers<[1], [0], [0], [1], [0, 0, 1, 1], [], []>} : vector<16x32xf32>, vector<32x32xf32>, vector<16x32xf32> -> vector<16x32xf32>
    %c0_11 = arith.constant 0 : index
    %c0_12 = arith.constant 0 : index
    %12 = vector.load %arg8[%c0_11, %c0_12] : memref<16x32xf32, #tpu.memory_space<vmem>>, vector<16x32xf32>
    tpu.vector_store %arg8[%c0_11, %c0_12], %11 {strides = array<i32>} : memref<16x32xf32, #tpu.memory_space<vmem>>, vector<16x32xf32>,
    %c0_13 = arith.constant 0 : index
    %c0_14 = arith.constant 0 : index
    %13 = vector.load %arg8[%c0_13, %c0_14] : memref<16x32xf32, #tpu.memory_space<vmem>>, vector<16x16xf32>
    %c0_15 = arith.constant 0 : index
    %c0_16 = arith.constant 0 : index
    %14 = vector.load %arg9[%c0_15, %c0_16] : memref<16x64xf32, #tpu.memory_space<vmem>>, vector<16x16xf32>
    %c0_17 = arith.constant 0 : index
    %c32 = arith.constant 32 : index
    %15 = vector.load %arg9[%c0_17, %c32] : memref<16x64xf32, #tpu.memory_space<vmem>>, vector<16x16xf32>
    %cst_18 = arith.constant dense<0.000000e+00> : vector<16x16xf32>
    %16 = tpu.matmul %13, %14, %cst_18 {dimension_numbers = #tpu.dot_dimension_numbers<[1], [1], [0], [0], [0, 0, 1, 0], [], []>} : vector<16x16xf32>, vector<16x16xf32>, vector<16x16xf32> -> vector<16x16xf32>
    %cst_19 = arith.constant dense<0xFF800000> : vector<16xf32>
    %17 = vector.multi_reduction <maximumf>, %16, %cst_19 [1] : vector<16x16xf32> to vector<16xf32>
    %18 = vector.shape_cast %17 : vector<16xf32> to vector<16x1xf32>
    %19 = vector.broadcast %18 : vector<16x1xf32> to vector<16x16xf32>
    %20 = arith.subf %16, %19 : vector<16x16xf32>
    %21 = math.exp %20 : vector<16x16xf32>
    %cst_20 = arith.constant dense<0.000000e+00> : vector<16xf32>
    %22 = vector.multi_reduction <add>, %21, %cst_20 [1] : vector<16x16xf32> to vector<16xf32>
    %23 = vector.shape_cast %22 : vector<16xf32> to vector<16x1xf32>
    %24 = tpu.reciprocal %23 : vector<16x1xf32> -> vector<16x1xf32>
    %25 = vector.broadcast %24 : vector<16x1xf32> to vector<16x16xf32>
    %26 = arith.mulf %21, %25 : vector<16x16xf32>
    %cst_21 = arith.constant dense<0.000000e+00> : vector<16x16xf32>
    %27 = tpu.matmul %26, %15, %cst_21 {dimension_numbers = #tpu.dot_dimension_numbers<[1], [0], [0], [1], [0, 0, 1, 1], [], []>} : vector<16x16xf32>, vector<16x16xf32>, vector<16x16xf32> -> vector<16x16xf32>
    %c0_22 = arith.constant 0 : index
    %c0_23 = arith.constant 0 : index
    %28 = vector.load %arg10[%c0_22, %c0_23] : memref<16x32xf32, #tpu.memory_space<vmem>>, vector<16x16xf32>
    tpu.vector_store %arg10[%c0_22, %c0_23], %27 {strides = array<i32>} : memref<16x32xf32, #tpu.memory_space<vmem>>, vector<16x16xf32>,
    %c0_24 = arith.constant 0 : index
    %c16 = arith.constant 16 : index
    %29 = vector.load %arg8[%c0_24, %c16] : memref<16x32xf32, #tpu.memory_space<vmem>>, vector<16x16xf32>
    %c0_25 = arith.constant 0 : index
    %c16_26 = arith.constant 16 : index
    %30 = vector.load %arg9[%c0_25, %c16_26] : memref<16x64xf32, #tpu.memory_space<vmem>>, vector<16x16xf32>
    %c0_27 = arith.constant 0 : index
    %c48 = arith.constant 48 : index
    %31 = vector.load %arg9[%c0_27, %c48] : memref<16x64xf32, #tpu.memory_space<vmem>>, vector<16x16xf32>
    %cst_28 = arith.constant dense<0.000000e+00> : vector<16x16xf32>
    %32 = tpu.matmul %29, %30, %cst_28 {dimension_numbers = #tpu.dot_dimension_numbers<[1], [1], [0], [0], [0, 0, 1, 0], [], []>} : vector<16x16xf32>, vector<16x16xf32>, vector<16x16xf32> -> vector<16x16xf32>
    %cst_29 = arith.constant dense<0xFF800000> : vector<16xf32>
    %33 = vector.multi_reduction <maximumf>, %32, %cst_29 [1] : vector<16x16xf32> to vector<16xf32>
    %34 = vector.shape_cast %33 : vector<16xf32> to vector<16x1xf32>
    %35 = vector.broadcast %34 : vector<16x1xf32> to vector<16x16xf32>
    %36 = arith.subf %32, %35 : vector<16x16xf32>
    %37 = math.exp %36 : vector<16x16xf32>
    %cst_30 = arith.constant dense<0.000000e+00> : vector<16xf32>
    %38 = vector.multi_reduction <add>, %37, %cst_30 [1] : vector<16x16xf32> to vector<16xf32>
    %39 = vector.shape_cast %38 : vector<16xf32> to vector<16x1xf32>
    %40 = tpu.reciprocal %39 : vector<16x1xf32> -> vector<16x1xf32>
    %41 = vector.broadcast %40 : vector<16x1xf32> to vector<16x16xf32>
    %42 = arith.mulf %37, %41 : vector<16x16xf32>
    %cst_31 = arith.constant dense<0.000000e+00> : vector<16x16xf32>
    %43 = tpu.matmul %42, %31, %cst_31 {dimension_numbers = #tpu.dot_dimension_numbers<[1], [0], [0], [1], [0, 0, 1, 1], [], []>} : vector<16x16xf32>, vector<16x16xf32>, vector<16x16xf32> -> vector<16x16xf32>
    %c0_32 = arith.constant 0 : index
    %c16_33 = arith.constant 16 : index
    %44 = vector.load %arg10[%c0_32, %c16_33] : memref<16x32xf32, #tpu.memory_space<vmem>>, vector<16x16xf32>
    tpu.vector_store %arg10[%c0_32, %c16_33], %43 {strides = array<i32>} : memref<16x32xf32, #tpu.memory_space<vmem>>, vector<16x16xf32>,
    %c0_34 = arith.constant 0 : index
    %c0_35 = arith.constant 0 : index
    %45 = vector.load %arg10[%c0_34, %c0_35] : memref<16x32xf32, #tpu.memory_space<vmem>>, vector<16x32xf32>
    %c0_36 = arith.constant 0 : index
    %c0_37 = arith.constant 0 : index
    %46 = vector.load %arg5[%c0_36, %c0_37] : memref<32x128xf32, #tpu.memory_space<vmem>>, vector<32x128xf32>
    %cst_38 = arith.constant dense<0.000000e+00> : vector<16x128xf32>
    %47 = tpu.matmul %45, %46, %cst_38 {dimension_numbers = #tpu.dot_dimension_numbers<[1], [0], [0], [1], [0, 0, 1, 1], [], []>} : vector<16x32xf32>, vector<32x128xf32>, vector<16x128xf32> -> vector<16x128xf32>
    %c0_39 = arith.constant 0 : index
    %c0_40 = arith.constant 0 : index
    %48 = vector.load %arg6[%c0_39, %c0_40] : memref<1x128xf32, #tpu.memory_space<vmem>>, vector<1x128xf32>
    %49 = vector.broadcast %48 : vector<1x128xf32> to vector<16x128xf32>
    %50 = arith.addf %47, %49 : vector<16x128xf32>
    %c0_41 = arith.constant 0 : index
    %c0_42 = arith.constant 0 : index
    %c0_43 = arith.constant 0 : index
    %51 = vector.load %arg7[%c0_41, %c0_42, %c0_43] : memref<1x16x128xf32, #tpu.memory_space<vmem>>, vector<1x16x128xf32>
    %52 = vector.shape_cast %51 : vector<1x16x128xf32> to vector<16x128xf32>
    %53 = vector.shape_cast %50 : vector<16x128xf32> to vector<1x16x128xf32>
    tpu.vector_store %arg7[%c0_41, %c0_42, %c0_43], %53 {strides = array<i32>} : memref<1x16x128xf32, #tpu.memory_space<vmem>>, vector<1x16x128xf32>,
    return
  }
  func.func @transform_0(%arg0: i32, %arg1: i32) -> (i32, i32, i32) {
    %c0_i32 = arith.constant 0 : i32
    %c0_i32_0 = arith.constant 0 : i32
    %c0_i32_1 = arith.constant 0 : i32
    return %arg0, %c0_i32, %c0_i32_0 : i32, i32, i32
  }
  func.func @transform_1(%arg0: i32, %arg1: i32) -> (i32, i32) {
    %c0_i32 = arith.constant 0 : i32
    %c0_i32_0 = arith.constant 0 : i32
    %c0_i32_1 = arith.constant 0 : i32
    return %c0_i32, %c0_i32_0 : i32, i32
  }
  func.func @transform_2(%arg0: i32, %arg1: i32) -> (i32, i32) {
    %c0_i32 = arith.constant 0 : i32
    %c0_i32_0 = arith.constant 0 : i32
    %c0_i32_1 = arith.constant 0 : i32
    return %c0_i32, %c0_i32_0 : i32, i32
  }
  func.func @transform_3(%arg0: i32, %arg1: i32) -> (i32, i32) {
    %c0_i32 = arith.constant 0 : i32
    %c0_i32_0 = arith.constant 0 : i32
    %c0_i32_1 = arith.constant 0 : i32
    return %c0_i32, %c0_i32_0 : i32, i32
  }
  func.func @transform_4(%arg0: i32, %arg1: i32) -> (i32, i32) {
    %c0_i32 = arith.constant 0 : i32
    %c0_i32_0 = arith.constant 0 : i32
    %c0_i32_1 = arith.constant 0 : i32
    return %c0_i32, %c0_i32_0 : i32, i32
  }
  func.func @transform_5(%arg0: i32, %arg1: i32) -> (i32, i32, i32) {
    %c0_i32 = arith.constant 0 : i32
    %c0_i32_0 = arith.constant 0 : i32
    return %arg0, %arg1, %c0_i32 : i32, i32, i32
  }
}

</mosaic_0001>

<llo_original>
// kernel: tpu_custom_call.1
$region0: #{tpu_custom_call.1}
  #allocation0 [shape = 'u32[]', space=smem, size = 0x4, offset = 0x4, fixed_abs, tag = 'smem constant byte address 0x4 - core index']
  #allocation1 [shape = 'u32[72,128]{1,0:T(1,128)}', space=vmem, size = 0x9000, scoped, tag = 'internal scratch']
  #allocation2 [shape = 'f32[16,32]{1,0:T(8,128)}', space=vmem, size = 0x2000, scoped, tag = 'scratch operand']
  #allocation3 [shape = 'f32[16,64]{1,0:T(8,128)}', space=vmem, size = 0x2000, scoped, tag = 'scratch operand']
  #allocation4 [shape = 'f32[16,32]{1,0:T(8,128)}', space=vmem, size = 0x2000, scoped, tag = 'scratch operand']
  %s0 = inlined_call_operand.hbm [shape: f32[2,16,32], index: 0, kind: input, shape index: {}]
  %s1 = inlined_call_operand.hbm [shape: f32[32,32], index: 1, kind: input, shape index: {}]
  %s2 = inlined_call_operand.hbm [shape: f32[32,64], index: 2, kind: input, shape index: {}]
  %s3 = inlined_call_operand.hbm [shape: f32[32,128], index: 3, kind: input, shape index: {}]
  %s4 = inlined_call_operand.vmem [shape: f32[1,128], index: 4, kind: input, shape index: {}]
  %s5 = inlined_call_operand.hbm [shape: f32[2,16,128], index: 5, kind: output, shape index: {}]
  %s6 = sld [smem:[#allocation0]]
  $region69: #{tpu_custom_call.1} parent=0
    _
  %s8 = ssub.s32 1, %s6
  %s9 = scalar_select 0, %s8, %s6
  $region1: #{tpu_custom_call.1} parent=0
    #allocation5 [shape = 'u8[16384]{0}', space=vmem, size = 0x4000, scoped, tag = 'input window, operand 0']
    #allocation6 [shape = 's32[2]{0}', space=sflag, size = 0x8, scoped, tag = 'scoped memory for tpu_custom_call.1']
    #allocation7 [shape = 's32[2]{0}', space=sflag, size = 0x8, scoped, tag = 'scoped memory for tpu_custom_call.1']
    #allocation8 [shape = 'u8[16384]{0}', space=vmem, size = 0x4000, scoped, tag = 'input window, operand 1, single buffered']
    #allocation9 [shape = 's32[1]{0}', space=sflag, size = 0x4, scoped, tag = 'scoped memory for tpu_custom_call.1']
    #allocation10 [shape = 'u8[16384]{0}', space=vmem, size = 0x4000, scoped, tag = 'input window, operand 2, single buffered']
    #allocation11 [shape = 'u8[16384]{0}', space=vmem, size = 0x4000, scoped, tag = 'input window, operand 3, single buffered']
    #allocation12 [shape = 's32[1]{0}', space=sflag, size = 0x4, scoped, tag = 'scoped memory for tpu_custom_call.1']
    #allocation13 [shape = 'u8[16384]{0}', space=vmem, size = 0x4000, scoped, tag = 'output window, operand 0']
    %10 = vsyncpa [#allocation6], 0
    %s11 = scalar_lea.sflag [#allocation6], 1
    %12 = vsyncpa %s11, 0
    %13 = vsyncpa [#allocation9], 0
    %14 = vsyncpa [#allocation12], 0
    %15 = vsyncpa [#allocation7], 0
    %s16 = scalar_lea.sflag [#allocation7], 1
    %17 = vsyncpa %s16, 0
    loop: start=0, step=1, limit=4
    $region2: #{tpu_custom_call.1} parent=1 // loop_pre_header
      _
    $region3: #{tpu_custom_call.1} parent=1 // loop_header
      %s19 = sphi 0, %s23
      %p20 = scmp.ge.s32.totalorder %s19, 4
      %s26 = sphi 0, %s38
      %s27 = sphi 0, %s34
      %s28 = sphi 0, %s26
      %s29 = sphi 0, %s27
      %s30 = sphi 0, %s28
      %s31 = sphi 0, %s29
      %s41 = sphi 0, %s43
      %s44 = sphi 0, %s41
      %s45 = sphi 0, %s44
      %s61 = sphi 0, %s45
      %s65 = sphi 0, %s65
      %s67 = sphi 0, %s65
      %s68 = sphi 0, %s67
      %s82 = sphi 0, %s68
      %s86 = sphi 0, %s86
      %s88 = sphi 0, %s86
      %s89 = sphi 0, %s88
      %s103 = sphi 0, %s89
      %s107 = sphi 0, %s107
      %s109 = sphi 0, %s107
      %s110 = sphi 0, %s109
      %s124 = sphi 0, %s110
      %s128 = sphi 0, %s128
      %s130 = sphi 0, %s128
      %s131 = sphi 0, %s130
      %s145 = sphi 0, %s131
      %s153 = sphi 0, %s155
      %s156 = sphi 0, %s153
      %s157 = sphi 0, %s156
      %s173 = sphi 0, %s157
    $region4: #{tpu_custom_call.1} parent=1 // loop_header_branch
      %22 = sbr.rel (%p20) target = $region8
    $region5: #{tpu_custom_call.1} parent=1 // loop_body
      %s24 = ssub.s32 %s19, 1
      %s25 = ssub.s32 %s19, 2
      %s32 = sadd.s32 1, %s27
      %p33 = scmp.ge.s32.totalorder %s32, 1
      %s34 = scalar_select %p33, 0, %s32
      %s35 = sadd.s32 1, %s26
      %s36 = scalar_select %p33, %s35, %s26
      %p37 = scmp.ge.s32.totalorder %s36, 2
      %s38 = scalar_select %p37, 0, %s36
      %s39 = ssub.s32 %s26, %s38
      %p40 = scmp.eq.s32.totalorder %s39, 0
      %s42 = sadd.s32 %s41, 1
      %s43 = scalar_select %p40, %s41, %s42
      %p46 = pneg %p40
      %p47 = scmp.eq.s32.totalorder %s19, 1
      %p48 = por %p46, %p47
      %p49 = scmp.ne.s32.totalorder %s41, %s44
      %p50 = scmp.eq.s32.totalorder %s19, 0
      %p51 = por %p49, %p50
      %p52 = scmp.ne.s32.totalorder %s41, %s44
      %p53 = scmp.eq.s32.totalorder %s24, 1
      %p54 = por %p52, %p53
      %p55 = scmp.ne.s32.totalorder %s44, %s45
      %p56 = scmp.eq.s32.totalorder %s24, 0
      %p57 = por %p55, %p56
      %p58 = scmp.ne.s32.totalorder %s44, %s45
      %p59 = scmp.eq.s32.totalorder %s25, 1
      %p60 = por %p58, %p59
      %p62 = scmp.ne.s32.totalorder %s45, %s61
      %p63 = scmp.eq.s32.totalorder %s25, 0
      %p64 = por %p62, %p63
      %s66 = sadd.s32 %s65, 1
      %p69 = scmp.eq.s32.totalorder %s19, 1
      %p70 = scmp.ne.s32.totalorder %s65, %s67
      %p71 = scmp.eq.s32.totalorder %s19, 0
      %p72 = por %p70, %p71
      %p73 = scmp.ne.s32.totalorder %s65, %s67
      %p74 = scmp.eq.s32.totalorder %s24, 1
      %p75 = por %p73, %p74
      %p76 = scmp.ne.s32.totalorder %s67, %s68
      %p77 = scmp.eq.s32.totalorder %s24, 0
      %p78 = por %p76, %p77
      %p79 = scmp.ne.s32.totalorder %s67, %s68
      %p80 = scmp.eq.s32.totalorder %s25, 1
      %p81 = por %p79, %p80
      %p83 = scmp.ne.s32.totalorder %s68, %s82
      %p84 = scmp.eq.s32.totalorder %s25, 0
      %p85 = por %p83, %p84
      %s87 = sadd.s32 %s86, 1
      %p90 = scmp.eq.s32.totalorder %s19, 1
      %p91 = scmp.ne.s32.totalorder %s86, %s88
      %p92 = scmp.eq.s32.totalorder %s19, 0
      %p93 = por %p91, %p92
      %p94 = scmp.ne.s32.totalorder %s86, %s88
      %p95 = scmp.eq.s32.totalorder %s24, 1
      %p96 = por %p94, %p95
      %p97 = scmp.ne.s32.totalorder %s88, %s89
      %p98 = scmp.eq.s32.totalorder %s24, 0
      %p99 = por %p97, %p98
      %p100 = scmp.ne.s32.totalorder %s88, %s89
      %p101 = scmp.eq.s32.totalorder %s25, 1
      %p102 = por %p100, %p101
      %p104 = scmp.ne.s32.totalorder %s89, %s103
      %p105 = scmp.eq.s32.totalorder %s25, 0
      %p106 = por %p104, %p105
      %s108 = sadd.s32 %s107, 1
      %p111 = scmp.eq.s32.totalorder %s19, 1
      %p112 = scmp.ne.s32.totalorder %s107, %s109
      %p113 = scmp.eq.s32.totalorder %s19, 0
      %p114 = por %p112, %p113
      %p115 = scmp.ne.s32.totalorder %s107, %s109
      %p116 = scmp.eq.s32.totalorder %s24, 1
      %p117 = por %p115, %p116
      %p118 = scmp.ne.s32.totalorder %s109, %s110
      %p119 = scmp.eq.s32.totalorder %s24, 0
      %p120 = por %p118, %p119
      %p121 = scmp.ne.s32.totalorder %s109, %s110
      %p122 = scmp.eq.s32.totalorder %s25, 1
      %p123 = por %p121, %p122
      %p125 = scmp.ne.s32.totalorder %s110, %s124
      %p126 = scmp.eq.s32.totalorder %s25, 0
      %p127 = por %p125, %p126
      %s129 = sadd.s32 %s128, 1
      %p132 = scmp.eq.s32.totalorder %s19, 1
      %p133 = scmp.ne.s32.totalorder %s128, %s130
      %p134 = scmp.eq.s32.totalorder %s19, 0
      %p135 = por %p133, %p134
      %p136 = scmp.ne.s32.totalorder %s128, %s130
      %p137 = scmp.eq.s32.totalorder %s24, 1
      %p138 = por %p136, %p137
      %p139 = scmp.ne.s32.totalorder %s130, %s131
      %p140 = scmp.eq.s32.totalorder %s24, 0
      %p141 = por %p139, %p140
      %p142 = scmp.ne.s32.totalorder %s130, %s131
      %p143 = scmp.eq.s32.totalorder %s25, 1
      %p144 = por %p142, %p143
      %p146 = scmp.ne.s32.totalorder %s131, %s145
      %p147 = scmp.eq.s32.totalorder %s25, 0
      %p148 = por %p146, %p147
      %s149 = ssub.s32 %s26, %s38
      %s150 = ssub.s32 %s27, %s34
      %s151 = sor.u32 %s149, %s150
      %p152 = scmp.eq.s32.totalorder %s151, 0
      %s154 = sadd.s32 %s153, 1
      %s155 = scalar_select %p152, %s153, %s154
      %p158 = pneg %p152
      %p159 = scmp.eq.s32.totalorder %s19, 1
      %p160 = por %p158, %p159
      %p161 = scmp.ne.s32.totalorder %s153, %s156
      %p162 = scmp.eq.s32.totalorder %s19, 0
      %p163 = por %p161, %p162
      %p164 = scmp.ne.s32.totalorder %s153, %s156
      %p165 = scmp.eq.s32.totalorder %s24, 1
      %p166 = por %p164, %p165
      %p167 = scmp.ne.s32.totalorder %s156, %s157
      %p168 = scmp.eq.s32.totalorder %s24, 0
      %p169 = por %p167, %p168
      %p170 = scmp.ne.s32.totalorder %s156, %s157
      %p171 = scmp.eq.s32.totalorder %s25, 1
      %p172 = por %p170, %p171
      %p174 = scmp.ne.s32.totalorder %s157, %s173
      %p175 = scmp.eq.s32.totalorder %s25, 0
      %p176 = por %p174, %p175
      %p177 = scmp.le.s32.totalorder 1, %s19
      %p178 = scmp.lt.s32.totalorder %s19, 3
      %p179 = pnand %p177, %p178
      %p180 = pneg %p179
      // Predicated region
      $region9: #{tpu_custom_call.1} parent=5 // pred_check
        _
      $region10: #{tpu_custom_call.1} parent=5 // pred_check_branch
        %182 = sbr.rel (%p179) target = $region12
      $region11: #{tpu_custom_call.1} parent=5 // pred_region
        %s183 = ssub.s32 %s19, 1
        // Predicated region
        $region13: #{tpu_custom_call.1} parent=11 // pred_check
          %p184 = pneg %p78
        $region14: #{tpu_custom_call.1} parent=11 // pred_check_branch
          %186 = sbr.rel (%p184) target = $region16
        $region15: #{tpu_custom_call.1} parent=11 // pred_region
          %188 = vsyncadd [#allocation9], 0
          %s189 = sshll.u32 %s1, 4
          %s190 = int_to_ptr.hbm [resolvable:$true] %s189
          %s191 = sshll.u32 [#allocation8], 4
          %s192 = int_to_ptr.vmem [resolvable:$true] %s191
          %197 = dma.hbm_to_vmem [thread:$0]  %s190, 512, %s192, [#allocation9], 128, 128, 8
        $region16: #{tpu_custom_call.1} parent=11 // pred_fallthru
          _
        // Predicated region
        $region17: #{tpu_custom_call.1} parent=11 // pred_check
          %p198 = pneg %p99
        $region18: #{tpu_custom_call.1} parent=11 // pred_check_branch
          %200 = sbr.rel (%p198) target = $region20
        $region19: #{tpu_custom_call.1} parent=11 // pred_region
          %202 = vsyncadd [#allocation9], 0
          %s203 = sshll.u32 %s2, 4
          %s204 = int_to_ptr.hbm [resolvable:$true] %s203
          %s205 = sshll.u32 [#allocation10], 4
          %s206 = int_to_ptr.vmem [resolvable:$true] %s205
          %211 = dma.hbm_to_vmem [thread:$0]  %s204, 512, %s206, [#allocation9], 128, 128, 8
        $region20: #{tpu_custom_call.1} parent=11 // pred_fallthru
          _
        // Predicated region
        $region21: #{tpu_custom_call.1} parent=11 // pred_check
          %p212 = pneg %p120
        $region22: #{tpu_custom_call.1} parent=11 // pred_check_branch
          %214 = sbr.rel (%p212) target = $region24
        $region23: #{tpu_custom_call.1} parent=11 // pred_region
          %216 = vsyncadd [#allocation12], 0
          %s217 = sshll.u32 %s3, 4
          %s218 = int_to_ptr.hbm [resolvable:$true] %s217
          %s219 = sshll.u32 [#allocation11], 4
          %s220 = int_to_ptr.vmem [resolvable:$true] %s219
          %225 = dma.hbm_to_vmem [thread:$0]  %s218, 512, %s220, [#allocation12], 128, 128, 8
        $region24: #{tpu_custom_call.1} parent=11 // pred_fallthru
          _
        // Predicated region
        $region25: #{tpu_custom_call.1} parent=11 // pred_check
          %p226 = pneg %p141
        $region26: #{tpu_custom_call.1} parent=11 // pred_check_branch
          %228 = sbr.rel (%p226) target = $region28
        $region27: #{tpu_custom_call.1} parent=11 // pred_region
          _
        $region28: #{tpu_custom_call.1} parent=11 // pred_fallthru
          _
      $region12: #{tpu_custom_call.1} parent=5 // pred_fallthru
        _
      %p229 = scmp.lt.s32.totalorder %s19, 2
      // Predicated region
      $region29: #{tpu_custom_call.1} parent=5 // pred_check
        %p230 = pneg %p229
      $region30: #{tpu_custom_call.1} parent=5 // pred_check_branch
        %232 = sbr.rel (%p230) target = $region32
      $region31: #{tpu_custom_call.1} parent=5 // pred_region
        // Predicated region
        $region33: #{tpu_custom_call.1} parent=31 // pred_check
          %p233 = pneg %p51
        $region34: #{tpu_custom_call.1} parent=31 // pred_check_branch
          %235 = sbr.rel (%p233) target = $region36
        $region35: #{tpu_custom_call.1} parent=31 // pred_region
          %s236 = sand.u32 %s41, 1
          %s237 = scalar_lea.sflag [#allocation6], %s236
          %s238 = sand.u32 %s41, 1
          %s239 = smul.addr %s238, 16
          %s240 = scalar_lea.vmem [#allocation5], %s239
          %242 = vsyncadd %s237, 0
          %s243 = smul.addr %s26, 2
          %s244 = smul.addr %s243, 8
          %s245 = scalar_lea.hbm %s0, %s244
          %s246 = sshll.u32 %s245, 4
          %s247 = int_to_ptr.hbm [resolvable:$true] %s246
          %s248 = sshll.u32 %s240, 4
          %s249 = int_to_ptr.vmem [resolvable:$true] %s248
          %254 = dma.hbm_to_vmem [thread:$0]  %s247, 256, %s249, %s237, 128, 128, 8
        $region36: #{tpu_custom_call.1} parent=31 // pred_fallthru
          _
      $region32: #{tpu_custom_call.1} parent=5 // pred_fallthru
        _
      %p255 = scmp.le.s32.totalorder 1, %s19
      %p256 = scmp.lt.s32.totalorder %s19, 3
      %p257 = pnand %p255, %p256
      %p258 = pneg %p257
      // Predicated region
      $region37: #{tpu_custom_call.1} parent=5 // pred_check
        _
      $region38: #{tpu_custom_call.1} parent=5 // pred_check_branch
        %260 = sbr.rel (%p257) target = $region40
      $region39: #{tpu_custom_call.1} parent=5 // pred_region
        %s261 = ssub.s32 %s19, 1
        %s262 = sand.u32 %s44, 1
        %s263 = scalar_lea.sflag [#allocation6], %s262
        %s264 = sand.u32 %s44, 1
        %s265 = smul.addr %s264, 16
        %s266 = scalar_lea.vmem [#allocation5], %s265
        // Predicated region
        $region41: #{tpu_custom_call.1} parent=39 // pred_check
          %p267 = pneg %p57
        $region42: #{tpu_custom_call.1} parent=39 // pred_check_branch
          %269 = sbr.rel (%p267) target = $region44
        $region43: #{tpu_custom_call.1} parent=39 // pred_region
          %271 = dma.done %s263, 256
        $region44: #{tpu_custom_call.1} parent=39 // pred_fallthru
          _
        // Predicated region
        $region45: #{tpu_custom_call.1} parent=39 // pred_check
          %p272 = pneg %p78
        $region46: #{tpu_custom_call.1} parent=39 // pred_check_branch
          %274 = sbr.rel (%p272) target = $region48
        $region47: #{tpu_custom_call.1} parent=39 // pred_region
          %276 = dma.done [#allocation9], 512
        $region48: #{tpu_custom_call.1} parent=39 // pred_fallthru
          _
        // Predicated region
        $region49: #{tpu_custom_call.1} parent=39 // pred_check
          %p277 = pneg %p99
        $region50: #{tpu_custom_call.1} parent=39 // pred_check_branch
          %279 = sbr.rel (%p277) target = $region52
        $region51: #{tpu_custom_call.1} parent=39 // pred_region
          %281 = dma.done [#allocation9], 512
        $region52: #{tpu_custom_call.1} parent=39 // pred_fallthru
          _
        // Predicated region
        $region53: #{tpu_custom_call.1} parent=39 // pred_check
          %p282 = pneg %p120
        $region54: #{tpu_custom_call.1} parent=39 // pred_check_branch
          %284 = sbr.rel (%p282) target = $region56
        $region55: #{tpu_custom_call.1} parent=39 // pred_region
          %286 = dma.done [#allocation12], 512
        $region56: #{tpu_custom_call.1} parent=39 // pred_fallthru
          _
        %s287 = sand.u32 %s44, 1
        %s288 = scalar_lea.sflag [#allocation6], %s287
        %s289 = sand.u32 %s44, 1
        %s290 = smul.addr %s289, 16
        %s291 = scalar_lea.vmem [#allocation5], %s290
        %p292 = pneg %p57
        %p293 = pneg %p54
        %p294 = pneg %p78
        %p295 = pneg %p75
        %p296 = pneg %p99
        %p297 = pneg %p96
        %p298 = pneg %p120
        %p299 = pneg %p117
        %p300 = pneg %p141
        %p301 = pneg %p138
        %p302 = pneg %p169
        %p303 = pneg %p166
        %s304 = sand.u32 %s156, 1
        %s305 = scalar_lea.sflag [#allocation7], %s304
        %s306 = sand.u32 %s156, 1
        %s307 = smul.addr %s306, 16
        %s308 = scalar_lea.vmem [#allocation13], %s307
        %s309 = smul.u32 2, %s29
        %s310 = smul.u32 %s29, 16
        %v311 = vld [vmem:[%s266] sm:$0xff]
        %v312 = vld [vmem:[%s266 + $0x8] sm:$0xff]
        %v313 = vld [vmem:[#allocation10] sm:$0xff]
        %v314 = vld [vmem:[#allocation10 + $0x8] sm:$0xff]
        %v315 = vld [vmem:[#allocation10 + $0x10] sm:$0xff]
        %v316 = vld [vmem:[#allocation10 + $0x18] sm:$0xff]
        %vm317 = vcmask 261120
        %v319 = vsel %vm317, %v311, 0
        %v322 = vsel %vm317, %v312, 0
        %324 = vmatpush.msra.mxu0 0.0
        %325 = vmatpush.msra.mxu0 0.0
        %326 = vmatpush.msra.mxu0 0.0
        %327 = vmatpush.msra.mxu0 0.0
        %328 = vmatpush.msra.mxu0 0.0
        %329 = vmatpush.msra.mxu0 0.0
        %330 = vmatpush.msra.mxu0 0.0
        %331 = vmatpush.msra.mxu0 0.0
        %332 = vmatpush.msra.mxu0 0.0
        %333 = vmatpush.msra.mxu0 0.0
        %334 = vmatpush.msra.mxu0 0.0
        %335 = vmatpush.msra.mxu0 0.0
        %336 = vmatpush.msra.mxu0 %v316
        %337 = vmatpush.msra.mxu0 %v315
        %338 = vmatpush.msra.mxu0 %v314
        %339 = vmatpush.msra.mxu0 %v313
        %340 = vmatmul.f32.gmra.mxu0 %v319
        %v341 = vpop.f32.mrf.mxu0
        %v342 = vadd.f32 0.0, %v341
        %343 = vmatmul.f32.gmra.mxu0 %v322
        %v344 = vpop.f32.mrf.mxu0
        %v345 = vadd.f32 0.0, %v344
        %346 = vdwg.mxu0
        %vm347 = vcmask 523264
        %348 = vst.msk [vmem:[#allocation3] sm:$0xff] %vm347, %v342
        %349 = vst.msk [vmem:[#allocation3 + $0x8] sm:$0xff] %vm347, %v345
        %s350 = scalar_lea.vmem %s266, %s310 [#allocation5]
        %v351 = vld [vmem:[%s350] sm:$0xff]
        %v352 = vld [vmem:[%s350 + $0x8] sm:$0xff]
        %v353 = vld [vmem:[#allocation8] sm:$0xff]
        %v354 = vld [vmem:[#allocation8 + $0x8] sm:$0xff]
        %v355 = vld [vmem:[#allocation8 + $0x10] sm:$0xff]
        %v356 = vld [vmem:[#allocation8 + $0x18] sm:$0xff]
        %v358 = vsel %vm317, %v351, 0
        %v361 = vsel %vm317, %v352, 0
        %363 = vmatpush.msra.mxu0 0.0
        %364 = vmatpush.msra.mxu0 0.0
        %365 = vmatpush.msra.mxu0 0.0
        %366 = vmatpush.msra.mxu0 0.0
        %367 = vmatpush.msra.mxu0 0.0
        %368 = vmatpush.msra.mxu0 0.0
        %369 = vmatpush.msra.mxu0 0.0
        %370 = vmatpush.msra.mxu0 0.0
        %371 = vmatpush.msra.mxu0 0.0
        %372 = vmatpush.msra.mxu0 0.0
        %373 = vmatpush.msra.mxu0 0.0
        %374 = vmatpush.msra.mxu0 0.0
        %375 = vmatpush.msra.mxu0 %v356
        %376 = vmatpush.msra.mxu0 %v355
        %377 = vmatpush.msra.mxu0 %v354
        %378 = vmatpush.msra.mxu0 %v353
        %379 = vmatmul.f32.gmra.mxu0 %v358
        %v380 = vpop.f32.mrf.mxu0
        %v381 = vadd.f32 0.0, %v380
        %382 = vmatmul.f32.gmra.mxu0 %v361
        %v383 = vpop.f32.mrf.mxu0
        %v384 = vadd.f32 0.0, %v383
        %385 = vdwg.mxu0
        %386 = vst.msk [vmem:[#allocation2] sm:$0xff] %vm317, %v381
        %387 = vst.msk [vmem:[#allocation2 + $0x8] sm:$0xff] %vm317, %v384
        %v388 = vld [vmem:[#allocation2] sm:$0xff]
        %v389 = vld [vmem:[#allocation2 + $0x8] sm:$0xff]
        %v390 = vld [vmem:[#allocation3] sm:$0xff]
        %v391 = vld [vmem:[#allocation3 + $0x8] sm:$0xff]
        %vm392 = vcmask 130048
        %v394 = vsel %vm392, %v388, 0
        %v397 = vsel %vm392, %v389, 0
        %v400 = vsel %vm392, %v390, 0
        %v403 = vsel %vm392, %v391, 0
        %405 = vmatpush.xpose.msra.mxu0 0.0
        %406 = vmatpush.xpose.msra.mxu0 0.0
        %407 = vmatpush.xpose.msra.mxu0 0.0
        %408 = vmatpush.xpose.msra.mxu0 0.0
        %409 = vmatpush.xpose.msra.mxu0 0.0
        %410 = vmatpush.xpose.msra.mxu0 0.0
        %411 = vmatpush.xpose.msra.mxu0 0.0
        %412 = vmatpush.xpose.msra.mxu0 0.0
        %413 = vmatpush.xpose.msra.mxu0 0.0
        %414 = vmatpush.xpose.msra.mxu0 0.0
        %415 = vmatpush.xpose.msra.mxu0 0.0
        %416 = vmatpush.xpose.msra.mxu0 0.0
        %417 = vmatpush.xpose.msra.mxu0 0.0
        %418 = vmatpush.xpose.msra.mxu0 0.0
        %419 = vmatpush.xpose.msra.mxu0 %v403
        %420 = vmatpush.xpose.msra.mxu0 %v400
        %421 = vmatmul.f32.gmra.mxu0 %v394
        %v422 = vpop.f32.mrf.mxu0
        %v423 = vadd.f32 0.0, %v422
        %424 = vmatmul.f32.gmra.mxu0 %v397
        %v425 = vpop.f32.mrf.mxu0
        %v426 = vadd.f32 0.0, %v425
        %427 = vdwg.mxu0
        %v428 = vsel %vm392, %v423, -inf
        %429 = vmax.xlane.f32.xlu0 %v428
        %v430 = vpop.xlane.xlu0 %429
        %v431 = vsel %vm392, %v426, -inf
        %432 = vmax.xlane.f32.xlu0 %v431
        %v433 = vpop.xlane.xlu0 %432
        %v434 = vsub.f32 %v423, %v430
        %v435 = vsub.f32 %v426, %v433
        %v436 = vmul.f32 %v434, 1.442695
        %v437 = vpow.pop %v436
        %v438 = vmul.f32 %v435, 1.442695
        %v439 = vpow.pop %v438
        %v440 = vsel %vm392, %v437, 0.0
        %441 = vadd.xlane.f32.xlu0 %v440
        %v442 = vpop.xlane.xlu0 %441
        %v443 = vsel %vm392, %v439, 0.0
        %444 = vadd.xlane.f32.xlu0 %v443
        %v445 = vpop.xlane.xlu0 %444
        %v446 = vrcp.pop %v442
        %v447 = vmul.f32 %v442, %v446
        %v448 = vsub.f32 1.0, %v447
        %v449 = vmul.f32 %v446, %v448
        %v450 = vadd.f32 %v446, %v449
        %vm451 = vweird.f32 %v442
        %vm452 = vweird.f32 %v446
        %vm453 = vmor %vm451, %vm452
        %v454 = vsel %vm453, %v446, %v450
        %v455 = vand.u32 2147483647, %v442
        %vm456 = vcmp.eq.f32.partialorder %v455, 8.507059e+37
        %v457 = vand.u32 %v442, 2147483648
        %v458 = vor.u32 1.1754944e-38, %v457
        %v459 = vsel %vm456, %v458, %v454
        %v460 = vrcp.pop %v445
        %v461 = vmul.f32 %v445, %v460
        %v462 = vsub.f32 1.0, %v461
        %v463 = vmul.f32 %v460, %v462
        %v464 = vadd.f32 %v460, %v463
        %vm465 = vweird.f32 %v445
        %vm466 = vweird.f32 %v460
        %vm467 = vmor %vm465, %vm466
        %v468 = vsel %vm467, %v460, %v464
        %v469 = vand.u32 2147483647, %v445
        %vm470 = vcmp.eq.f32.partialorder %v469, 8.507059e+37
        %v471 = vand.u32 %v445, 2147483648
        %v472 = vor.u32 1.1754944e-38, %v471
        %v473 = vsel %vm470, %v472, %v468
        %v474 = vmul.f32 %v437, %v459
        %v475 = vmul.f32 %v439, %v473
        %476 = vrot.lane.b32.xlu0 %v390, 96
        %v477 = vpop.permute.xlu0 %476
        %478 = vrot.lane.b32.xlu0 %v391, 96
        %v479 = vpop.permute.xlu0 %478
        %v483 = vsel %vm392, %v474, 0
        %v486 = vsel %vm392, %v475, 0
        %488 = vmatpush.msra.mxu0 0.0
        %489 = vmatpush.msra.mxu0 0.0
        %490 = vmatpush.msra.mxu0 0.0
        %491 = vmatpush.msra.mxu0 0.0
        %492 = vmatpush.msra.mxu0 0.0
        %493 = vmatpush.msra.mxu0 0.0
        %494 = vmatpush.msra.mxu0 0.0
        %495 = vmatpush.msra.mxu0 0.0
        %496 = vmatpush.msra.mxu0 0.0
        %497 = vmatpush.msra.mxu0 0.0
        %498 = vmatpush.msra.mxu0 0.0
        %499 = vmatpush.msra.mxu0 0.0
        %500 = vmatpush.msra.mxu0 0.0
        %501 = vmatpush.msra.mxu0 0.0
        %502 = vmatpush.msra.mxu0 %v479
        %503 = vmatpush.msra.mxu0 %v477
        %504 = vmatmul.f32.gmra.mxu0 %v483
        %v505 = vpop.f32.mrf.mxu0
        %v506 = vadd.f32 0.0, %v505
        %507 = vmatmul.f32.gmra.mxu0 %v486
        %v508 = vpop.f32.mrf.mxu0
        %v509 = vadd.f32 0.0, %v508
        %510 = vdwg.mxu0
        %511 = vst.msk [vmem:[#allocation4] sm:$0xff] %vm392, %v506
        %512 = vst.msk [vmem:[#allocation4 + $0x8] sm:$0xff] %vm392, %v509
        %v513 = vld [vmem:[#allocation2] sm:$0xff]
        %v514 = vld [vmem:[#allocation2 + $0x8] sm:$0xff]
        %v515 = vld [vmem:[#allocation3] sm:$0xff]
        %v516 = vld [vmem:[#allocation3 + $0x8] sm:$0xff]
        %519 = vrot.lane.b32.xlu0 %v513, 112
        %v520 = vpop.permute.xlu0 %519
        %521 = vrot.lane.b32.xlu0 %v514, 112
        %v522 = vpop.permute.xlu0 %521
        %525 = vrot.lane.b32.xlu0 %v515, 112
        %v526 = vpop.permute.xlu0 %525
        %527 = vrot.lane.b32.xlu0 %v516, 112
        %v528 = vpop.permute.xlu0 %527
        %v529 = vsel %vm392, %v520, 0
        %v531 = vsel %vm392, %v522, 0
        %v533 = vsel %vm392, %v526, 0
        %v535 = vsel %vm392, %v528, 0
        %537 = vmatpush.xpose.msra.mxu0 0.0
        %538 = vmatpush.xpose.msra.mxu0 0.0
        %539 = vmatpush.xpose.msra.mxu0 0.0
        %540 = vmatpush.xpose.msra.mxu0 0.0
        %541 = vmatpush.xpose.msra.mxu0 0.0
        %542 = vmatpush.xpose.msra.mxu0 0.0
        %543 = vmatpush.xpose.msra.mxu0 0.0
        %544 = vmatpush.xpose.msra.mxu0 0.0
        %545 = vmatpush.xpose.msra.mxu0 0.0
        %546 = vmatpush.xpose.msra.mxu0 0.0
        %547 = vmatpush.xpose.msra.mxu0 0.0
        %548 = vmatpush.xpose.msra.mxu0 0.0
        %549 = vmatpush.xpose.msra.mxu0 0.0
        %550 = vmatpush.xpose.msra.mxu0 0.0
        %551 = vmatpush.xpose.msra.mxu0 %v535
        %552 = vmatpush.xpose.msra.mxu0 %v533
        %553 = vmatmul.f32.gmra.mxu0 %v529
        %v554 = vpop.f32.mrf.mxu0
        %v555 = vadd.f32 0.0, %v554
        %556 = vmatmul.f32.gmra.mxu0 %v531
        %v557 = vpop.f32.mrf.mxu0
        %v558 = vadd.f32 0.0, %v557
        %559 = vdwg.mxu0
        %v560 = vsel %vm392, %v555, -inf
        %561 = vmax.xlane.f32.xlu0 %v560
        %v562 = vpop.xlane.xlu0 %561
        %v563 = vsel %vm392, %v558, -inf
        %564 = vmax.xlane.f32.xlu0 %v563
        %v565 = vpop.xlane.xlu0 %564
        %v566 = vsub.f32 %v555, %v562
        %v567 = vsub.f32 %v558, %v565
        %v568 = vmul.f32 %v566, 1.442695
        %v569 = vpow.pop %v568
        %v570 = vmul.f32 %v567, 1.442695
        %v571 = vpow.pop %v570
        %v572 = vsel %vm392, %v569, 0.0
        %573 = vadd.xlane.f32.xlu0 %v572
        %v574 = vpop.xlane.xlu0 %573
        %v575 = vsel %vm392, %v571, 0.0
        %576 = vadd.xlane.f32.xlu0 %v575
        %v577 = vpop.xlane.xlu0 %576
        %v578 = vrcp.pop %v574
        %v579 = vmul.f32 %v574, %v578
        %v580 = vsub.f32 1.0, %v579
        %v581 = vmul.f32 %v578, %v580
        %v582 = vadd.f32 %v578, %v581
        %vm583 = vweird.f32 %v574
        %vm584 = vweird.f32 %v578
        %vm585 = vmor %vm583, %vm584
        %v586 = vsel %vm585, %v578, %v582
        %v587 = vand.u32 2147483647, %v574
        %vm588 = vcmp.eq.f32.partialorder %v587, 8.507059e+37
        %v589 = vand.u32 %v574, 2147483648
        %v590 = vor.u32 1.1754944e-38, %v589
        %v591 = vsel %vm588, %v590, %v586
        %v592 = vrcp.pop %v577
        %v593 = vmul.f32 %v577, %v592
        %v594 = vsub.f32 1.0, %v593
        %v595 = vmul.f32 %v592, %v594
        %v596 = vadd.f32 %v592, %v595
        %vm597 = vweird.f32 %v577
        %vm598 = vweird.f32 %v592
        %vm599 = vmor %vm597, %vm598
        %v600 = vsel %vm599, %v592, %v596
        %v601 = vand.u32 2147483647, %v577
        %vm602 = vcmp.eq.f32.partialorder %v601, 8.507059e+37
        %v603 = vand.u32 %v577, 2147483648
        %v604 = vor.u32 1.1754944e-38, %v603
        %v605 = vsel %vm602, %v604, %v600
        %v606 = vmul.f32 %v569, %v591
        %v607 = vmul.f32 %v571, %v605
        %608 = vrot.lane.b32.xlu0 %v515, 80
        %v609 = vpop.permute.xlu0 %608
        %610 = vrot.lane.b32.xlu0 %v516, 80
        %v611 = vpop.permute.xlu0 %610
        %v615 = vsel %vm392, %v606, 0
        %v618 = vsel %vm392, %v607, 0
        %620 = vmatpush.msra.mxu0 0.0
        %621 = vmatpush.msra.mxu0 0.0
        %622 = vmatpush.msra.mxu0 0.0
        %623 = vmatpush.msra.mxu0 0.0
        %624 = vmatpush.msra.mxu0 0.0
        %625 = vmatpush.msra.mxu0 0.0
        %626 = vmatpush.msra.mxu0 0.0
        %627 = vmatpush.msra.mxu0 0.0
        %628 = vmatpush.msra.mxu0 0.0
        %629 = vmatpush.msra.mxu0 0.0
        %630 = vmatpush.msra.mxu0 0.0
        %631 = vmatpush.msra.mxu0 0.0
        %632 = vmatpush.msra.mxu0 0.0
        %633 = vmatpush.msra.mxu0 0.0
        %634 = vmatpush.msra.mxu0 %v611
        %635 = vmatpush.msra.mxu0 %v609
        %636 = vmatmul.f32.gmra.mxu0 %v615
        %v637 = vpop.f32.mrf.mxu0
        %v638 = vadd.f32 0.0, %v637
        %639 = vmatmul.f32.gmra.mxu0 %v618
        %v640 = vpop.f32.mrf.mxu0
        %v641 = vadd.f32 0.0, %v640
        %642 = vdwg.mxu0
        %645 = vrot.lane.b32.xlu0 %v638, 16
        %v646 = vpop.permute.xlu0 %645
        %647 = vrot.lane.b32.xlu0 %v641, 16
        %v648 = vpop.permute.xlu0 %647
        %vm651 = vcmask 261248
        %652 = vst.msk [vmem:[#allocation4] sm:$0xff] %vm651, %v646
        %653 = vst.msk [vmem:[#allocation4 + $0x8] sm:$0xff] %vm651, %v648
        %v654 = vld [vmem:[#allocation4] sm:$0xff]
        %v655 = vld [vmem:[#allocation4 + $0x8] sm:$0xff]
        %v656 = vld [vmem:[#allocation11] sm:$0xff]
        %v657 = vld [vmem:[#allocation11 + $0x8] sm:$0xff]
        %v658 = vld [vmem:[#allocation11 + $0x10] sm:$0xff]
        %v659 = vld [vmem:[#allocation11 + $0x18] sm:$0xff]
        %v660 = vld [vmem:[%s4] sm:$0x1]
        %v662 = vperm.slane %v660, 0
        %v665 = vsel %vm317, %v654, 0
        %v668 = vsel %vm317, %v655, 0
        %670 = vmatpush.msra.mxu0 0.0
        %671 = vmatpush.msra.mxu0 0.0
        %672 = vmatpush.msra.mxu0 0.0
        %673 = vmatpush.msra.mxu0 0.0
        %674 = vmatpush.msra.mxu0 0.0
        %675 = vmatpush.msra.mxu0 0.0
        %676 = vmatpush.msra.mxu0 0.0
        %677 = vmatpush.msra.mxu0 0.0
        %678 = vmatpush.msra.mxu0 0.0
        %679 = vmatpush.msra.mxu0 0.0
        %680 = vmatpush.msra.mxu0 0.0
        %681 = vmatpush.msra.mxu0 0.0
        %682 = vmatpush.msra.mxu0 %v659
        %683 = vmatpush.msra.mxu0 %v658
        %684 = vmatpush.msra.mxu0 %v657
        %685 = vmatpush.msra.mxu0 %v656
        %686 = vmatmul.f32.gmra.mxu0 %v665
        %v687 = vpop.f32.mrf.mxu0
        %v688 = vadd.f32 %v662, %v687
        %689 = vmatmul.f32.gmra.mxu0 %v668
        %v690 = vpop.f32.mrf.mxu0
        %v691 = vadd.f32 %v662, %v690
        %692 = vdwg.mxu0
        %693 = vst [vmem:[%s308] sm:$0xff] %v688
        %694 = vst [vmem:[%s308 + $0x8] sm:$0xff] %v691
        %s695 = sand.u32 %s156, 1
        %s696 = scalar_lea.sflag [#allocation7], %s695
        %s697 = sand.u32 %s156, 1
        %s698 = smul.addr %s697, 16
        %s699 = scalar_lea.vmem [#allocation13], %s698
        // Predicated region
        $region57: #{tpu_custom_call.1} parent=39 // pred_check
          %p700 = pneg %p166
        $region58: #{tpu_custom_call.1} parent=39 // pred_check_branch
          %702 = sbr.rel (%p700) target = $region60
        $region59: #{tpu_custom_call.1} parent=39 // pred_region
          %s703 = smul.u32 2, %s29
          %705 = vsyncadd %s696, 0
          %s706 = smul.addr %s28, 2
          %s707 = sadd.s32 %s703, %s706
          %s708 = smul.addr %s707, 8
          %s709 = scalar_lea.hbm %s5, %s708
          %s710 = sshll.u32 %s699, 4
          %s711 = int_to_ptr.vmem [resolvable:$true] %s710
          %s712 = sshll.u32 %s709, 4
          %s713 = int_to_ptr.hbm [resolvable:$true] %s712
          %718 = dma.vmem_to_hbm [thread:$0]  %s711, 256, %s713, %s696, 128, 128, 8
        $region60: #{tpu_custom_call.1} parent=39 // pred_fallthru
          _
      $region40: #{tpu_custom_call.1} parent=5 // pred_fallthru
        _
      %p719 = scmp.le.s32.totalorder 2, %s19
      // Predicated region
      $region61: #{tpu_custom_call.1} parent=5 // pred_check
        %p720 = pneg %p719
      $region62: #{tpu_custom_call.1} parent=5 // pred_check_branch
        %722 = sbr.rel (%p720) target = $region64
      $region63: #{tpu_custom_call.1} parent=5 // pred_region
        %s723 = ssub.s32 %s19, 2
        // Predicated region
        $region65: #{tpu_custom_call.1} parent=63 // pred_check
          %p724 = pneg %p172
        $region66: #{tpu_custom_call.1} parent=63 // pred_check_branch
          %726 = sbr.rel (%p724) target = $region68
        $region67: #{tpu_custom_call.1} parent=63 // pred_region
          %s727 = sand.u32 %s157, 1
          %s728 = scalar_lea.sflag [#allocation7], %s727
          %s729 = sand.u32 %s157, 1
          %s730 = smul.addr %s729, 16
          %s731 = scalar_lea.vmem [#allocation13], %s730
          %733 = dma.done %s728, 256
        $region68: #{tpu_custom_call.1} parent=63 // pred_fallthru
          _
      $region64: #{tpu_custom_call.1} parent=5 // pred_fallthru
        _
    $region6: #{tpu_custom_call.1} parent=1 // loop_footer
      %s23 = sadd.s32 1, %s19
    $region7: #{tpu_custom_call.1} parent=1 // loop_footer_branch
      %18 = sbr.rel target = $region3
    $region8: #{tpu_custom_call.1} parent=1 // loop_exit
      _
    %734 = vsyncpa [#allocation6], 1
    %s735 = scalar_lea.sflag [#allocation6], 1
    %736 = vsyncpa %s735, 1
    %737 = vsyncpa [#allocation9], 1
    %738 = vsyncpa [#allocation12], 1
    %739 = vsyncpa [#allocation7], 1
    %s740 = scalar_lea.sflag [#allocation7], 1
    %741 = vsyncpa %s740, 1

// kernel: tpu_custom_call.1
$region0: #{tpu_custom_call.1}
  #allocation0 [shape = 'u32[]', space=smem, size = 0x4, offset = 0x4, fixed_abs, tag = 'smem constant byte address 0x4 - core index']
  #allocation1 [shape = 'u32[72,128]{1,0:T(1,128)}', space=vmem, size = 0x9000, scoped, tag = 'internal scratch']
  #allocation2 [shape = 'f32[16,32]{1,0:T(8,128)}', space=vmem, size = 0x2000, scoped, tag = 'scratch operand']
  #allocation3 [shape = 'f32[16,64]{1,0:T(8,128)}', space=vmem, size = 0x2000, scoped, tag = 'scratch operand']
  #allocation4 [shape = 'f32[16,32]{1,0:T(8,128)}', space=vmem, size = 0x2000, scoped, tag = 'scratch operand']
  %s0 = inlined_call_operand.hbm [shape: f32[2,16,32], index: 0, kind: input, shape index: {}]
  %s1 = inlined_call_operand.hbm [shape: f32[32,32], index: 1, kind: input, shape index: {}]
  %s2 = inlined_call_operand.hbm [shape: f32[32,64], index: 2, kind: input, shape index: {}]
  %s3 = inlined_call_operand.hbm [shape: f32[32,128], index: 3, kind: input, shape index: {}]
  %s4 = inlined_call_operand.vmem [shape: f32[1,128], index: 4, kind: input, shape index: {}]
  %s5 = inlined_call_operand.hbm [shape: f32[2,16,128], index: 5, kind: output, shape index: {}]
  %s6 = sld [smem:[#allocation0]]
  $region69: #{tpu_custom_call.1} parent=0
    _
  %s8 = ssub.s32 1, %s6
  %s9 = scalar_select 0, %s8, %s6
  $region1: #{tpu_custom_call.1} parent=0
    #allocation5 [shape = 'u8[16384]{0}', space=vmem, size = 0x4000, scoped, tag = 'input window, operand 0']
    #allocation6 [shape = 's32[2]{0}', space=sflag, size = 0x8, scoped, tag = 'scoped memory for tpu_custom_call.1']
    #allocation7 [shape = 's32[2]{0}', space=sflag, size = 0x8, scoped, tag = 'scoped memory for tpu_custom_call.1']
    #allocation8 [shape = 'u8[16384]{0}', space=vmem, size = 0x4000, scoped, tag = 'input window, operand 1, single buffered']
    #allocation9 [shape = 's32[1]{0}', space=sflag, size = 0x4, scoped, tag = 'scoped memory for tpu_custom_call.1']
    #allocation10 [shape = 'u8[16384]{0}', space=vmem, size = 0x4000, scoped, tag = 'input window, operand 2, single buffered']
    #allocation11 [shape = 'u8[16384]{0}', space=vmem, size = 0x4000, scoped, tag = 'input window, operand 3, single buffered']
    #allocation12 [shape = 's32[1]{0}', space=sflag, size = 0x4, scoped, tag = 'scoped memory for tpu_custom_call.1']
    #allocation13 [shape = 'u8[16384]{0}', space=vmem, size = 0x4000, scoped, tag = 'output window, operand 0']
    %10 = vsyncpa [#allocation6], 0
    %s11 = scalar_lea.sflag [#allocation6], 1
    %12 = vsyncpa %s11, 0
    %13 = vsyncpa [#allocation9], 0
    %14 = vsyncpa [#allocation12], 0
    %15 = vsyncpa [#allocation7], 0
    %s16 = scalar_lea.sflag [#allocation7], 1
    %17 = vsyncpa %s16, 0
    loop: start=0, step=1, limit=4
    $region2: #{tpu_custom_call.1} parent=1 // loop_pre_header
      _
    $region3: #{tpu_custom_call.1} parent=1 // loop_header
      %s19 = sphi 0, %s23
      %p20 = scmp.ge.s32.totalorder %s19, 4
      %s26 = sphi 0, %s38
      %s27 = sphi 0, %s34
      %s28 = sphi 0, %s26
      %s29 = sphi 0, %s27
      %s30 = sphi 0, %s28
      %s31 = sphi 0, %s29
      %s41 = sphi 0, %s43
      %s44 = sphi 0, %s41
      %s45 = sphi 0, %s44
      %s61 = sphi 0, %s45
      %s65 = sphi 0, %s65
      %s67 = sphi 0, %s65
      %s68 = sphi 0, %s67
      %s82 = sphi 0, %s68
      %s86 = sphi 0, %s86
      %s88 = sphi 0, %s86
      %s89 = sphi 0, %s88
      %s103 = sphi 0, %s89
      %s107 = sphi 0, %s107
      %s109 = sphi 0, %s107
      %s110 = sphi 0, %s109
      %s124 = sphi 0, %s110
      %s128 = sphi 0, %s128
      %s130 = sphi 0, %s128
      %s131 = sphi 0, %s130
      %s145 = sphi 0, %s131
      %s153 = sphi 0, %s155
      %s156 = sphi 0, %s153
      %s157 = sphi 0, %s156
      %s173 = sphi 0, %s157
    $region4: #{tpu_custom_call.1} parent=1 // loop_header_branch
      %22 = sbr.rel (%p20) target = $region8
    $region5: #{tpu_custom_call.1} parent=1 // loop_body
      %s24 = ssub.s32 %s19, 1
      %s25 = ssub.s32 %s19, 2
      %s32 = sadd.s32 1, %s27
      %p33 = scmp.ge.s32.totalorder %s32, 1
      %s34 = scalar_select %p33, 0, %s32
      %s35 = sadd.s32 1, %s26
      %s36 = scalar_select %p33, %s35, %s26
      %p37 = scmp.ge.s32.totalorder %s36, 2
      %s38 = scalar_select %p37, 0, %s36
      %s39 = ssub.s32 %s26, %s38
      %p40 = scmp.eq.s32.totalorder %s39, 0
      %s42 = sadd.s32 %s41, 1
      %s43 = scalar_select %p40, %s41, %s42
      %p46 = pneg %p40
      %p47 = scmp.eq.s32.totalorder %s19, 1
      %p48 = por %p46, %p47
      %p49 = scmp.ne.s32.totalorder %s41, %s44
      %p50 = scmp.eq.s32.totalorder %s19, 0
      %p51 = por %p49, %p50
      %p52 = scmp.ne.s32.totalorder %s41, %s44
      %p53 = scmp.eq.s32.totalorder %s24, 1
      %p54 = por %p52, %p53
      %p55 = scmp.ne.s32.totalorder %s44, %s45
      %p56 = scmp.eq.s32.totalorder %s24, 0
      %p57 = por %p55, %p56
      %p58 = scmp.ne.s32.totalorder %s44, %s45
      %p59 = scmp.eq.s32.totalorder %s25, 1
      %p60 = por %p58, %p59
      %p62 = scmp.ne.s32.totalorder %s45, %s61
      %p63 = scmp.eq.s32.totalorder %s25, 0
      %p64 = por %p62, %p63
      %s66 = sadd.s32 %s65, 1
      %p69 = scmp.eq.s32.totalorder %s19, 1
      %p70 = scmp.ne.s32.totalorder %s65, %s67
      %p71 = scmp.eq.s32.totalorder %s19, 0
      %p72 = por %p70, %p71
      %p73 = scmp.ne.s32.totalorder %s65, %s67
      %p74 = scmp.eq.s32.totalorder %s24, 1
      %p75 = por %p73, %p74
      %p76 = scmp.ne.s32.totalorder %s67, %s68
      %p77 = scmp.eq.s32.totalorder %s24, 0
      %p78 = por %p76, %p77
      %p79 = scmp.ne.s32.totalorder %s67, %s68
      %p80 = scmp.eq.s32.totalorder %s25, 1
      %p81 = por %p79, %p80
      %p83 = scmp.ne.s32.totalorder %s68, %s82
      %p84 = scmp.eq.s32.totalorder %s25, 0
      %p85 = por %p83, %p84
      %s87 = sadd.s32 %s86, 1
      %p90 = scmp.eq.s32.totalorder %s19, 1
      %p91 = scmp.ne.s32.totalorder %s86, %s88
      %p92 = scmp.eq.s32.totalorder %s19, 0
      %p93 = por %p91, %p92
      %p94 = scmp.ne.s32.totalorder %s86, %s88
      %p95 = scmp.eq.s32.totalorder %s24, 1
      %p96 = por %p94, %p95
      %p97 = scmp.ne.s32.totalorder %s88, %s89
      %p98 = scmp.eq.s32.totalorder %s24, 0
      %p99 = por %p97, %p98
      %p100 = scmp.ne.s32.totalorder %s88, %s89
      %p101 = scmp.eq.s32.totalorder %s25, 1
      %p102 = por %p100, %p101
      %p104 = scmp.ne.s32.totalorder %s89, %s103
      %p105 = scmp.eq.s32.totalorder %s25, 0
      %p106 = por %p104, %p105
      %s108 = sadd.s32 %s107, 1
      %p111 = scmp.eq.s32.totalorder %s19, 1
      %p112 = scmp.ne.s32.totalorder %s107, %s109
      %p113 = scmp.eq.s32.totalorder %s19, 0
      %p114 = por %p112, %p113
      %p115 = scmp.ne.s32.totalorder %s107, %s109
      %p116 = scmp.eq.s32.totalorder %s24, 1
      %p117 = por %p115, %p116
      %p118 = scmp.ne.s32.totalorder %s109, %s110
      %p119 = scmp.eq.s32.totalorder %s24, 0
      %p120 = por %p118, %p119
      %p121 = scmp.ne.s32.totalorder %s109, %s110
      %p122 = scmp.eq.s32.totalorder %s25, 1
      %p123 = por %p121, %p122
      %p125 = scmp.ne.s32.totalorder %s110, %s124
      %p126 = scmp.eq.s32.totalorder %s25, 0
      %p127 = por %p125, %p126
      %s129 = sadd.s32 %s128, 1
      %p132 = scmp.eq.s32.totalorder %s19, 1
      %p133 = scmp.ne.s32.totalorder %s128, %s130
      %p134 = scmp.eq.s32.totalorder %s19, 0
      %p135 = por %p133, %p134
      %p136 = scmp.ne.s32.totalorder %s128, %s130
      %p137 = scmp.eq.s32.totalorder %s24, 1
      %p138 = por %p136, %p137
      %p139 = scmp.ne.s32.totalorder %s130, %s131
      %p140 = scmp.eq.s32.totalorder %s24, 0
      %p141 = por %p139, %p140
      %p142 = scmp.ne.s32.totalorder %s130, %s131
      %p143 = scmp.eq.s32.totalorder %s25, 1
      %p144 = por %p142, %p143
      %p146 = scmp.ne.s32.totalorder %s131, %s145
      %p147 = scmp.eq.s32.totalorder %s25, 0
      %p148 = por %p146, %p147
      %s149 = ssub.s32 %s26, %s38
      %s150 = ssub.s32 %s27, %s34
      %s151 = sor.u32 %s149, %s150
      %p152 = scmp.eq.s32.totalorder %s151, 0
      %s154 = sadd.s32 %s153, 1
      %s155 = scalar_select %p152, %s153, %s154
      %p158 = pneg %p152
      %p159 = scmp.eq.s32.totalorder %s19, 1
      %p160 = por %p158, %p159
      %p161 = scmp.ne.s32.totalorder %s153, %s156
      %p162 = scmp.eq.s32.totalorder %s19, 0
      %p163 = por %p161, %p162
      %p164 = scmp.ne.s32.totalorder %s153, %s156
      %p165 = scmp.eq.s32.totalorder %s24, 1
      %p166 = por %p164, %p165
      %p167 = scmp.ne.s32.totalorder %s156, %s157
      %p168 = scmp.eq.s32.totalorder %s24, 0
      %p169 = por %p167, %p168
      %p170 = scmp.ne.s32.totalorder %s156, %s157
      %p171 = scmp.eq.s32.totalorder %s25, 1
      %p172 = por %p170, %p171
      %p174 = scmp.ne.s32.totalorder %s157, %s173
      %p175 = scmp.eq.s32.totalorder %s25, 0
      %p176 = por %p174, %p175
      %p177 = scmp.le.s32.totalorder 1, %s19
      %p178 = scmp.lt.s32.totalorder %s19, 3
      %p179 = pnand %p177, %p178
      %p180 = pneg %p179
      // Predicated region
      $region9: #{tpu_custom_call.1} parent=5 // pred_check
        _
      $region10: #{tpu_custom_call.1} parent=5 // pred_check_branch
        %182 = sbr.rel (%p179) target = $region12
      $region11: #{tpu_custom_call.1} parent=5 // pred_region
        %s183 = ssub.s32 %s19, 1
        // Predicated region
        $region13: #{tpu_custom_call.1} parent=11 // pred_check
          %p184 = pneg %p78
        $region14: #{tpu_custom_call.1} parent=11 // pred_check_branch
          %186 = sbr.rel (%p184) target = $region16
        $region15: #{tpu_custom_call.1} parent=11 // pred_region
          %188 = vsyncadd [#allocation9], 0
          %s189 = sshll.u32 %s1, 4
          %s190 = int_to_ptr.hbm [resolvable:$true] %s189
          %s191 = sshll.u32 [#allocation8], 4
          %s192 = int_to_ptr.vmem [resolvable:$true] %s191
          %197 = dma.hbm_to_vmem [thread:$0]  %s190, 512, %s192, [#allocation9], 128, 128, 8
        $region16: #{tpu_custom_call.1} parent=11 // pred_fallthru
          _
        // Predicated region
        $region17: #{tpu_custom_call.1} parent=11 // pred_check
          %p198 = pneg %p99
        $region18: #{tpu_custom_call.1} parent=11 // pred_check_branch
          %200 = sbr.rel (%p198) target = $region20
        $region19: #{tpu_custom_call.1} parent=11 // pred_region
          %202 = vsyncadd [#allocation9], 0
          %s203 = sshll.u32 %s2, 4
          %s204 = int_to_ptr.hbm [resolvable:$true] %s203
          %s205 = sshll.u32 [#allocation10], 4
          %s206 = int_to_ptr.vmem [resolvable:$true] %s205
          %211 = dma.hbm_to_vmem [thread:$0]  %s204, 512, %s206, [#allocation9], 128, 128, 8
        $region20: #{tpu_custom_call.1} parent=11 // pred_fallthru
          _
        // Predicated region
        $region21: #{tpu_custom_call.1} parent=11 // pred_check
          %p212 = pneg %p120
        $region22: #{tpu_custom_call.1} parent=11 // pred_check_branch
          %214 = sbr.rel (%p212) target = $region24
        $region23: #{tpu_custom_call.1} parent=11 // pred_region
          %216 = vsyncadd [#allocation12], 0
          %s217 = sshll.u32 %s3, 4
          %s218 = int_to_ptr.hbm [resolvable:$true] %s217
          %s219 = sshll.u32 [#allocation11], 4
          %s220 = int_to_ptr.vmem [resolvable:$true] %s219
          %225 = dma.hbm_to_vmem [thread:$0]  %s218, 512, %s220, [#allocation12], 128, 128, 8
        $region24: #{tpu_custom_call.1} parent=11 // pred_fallthru
          _
        // Predicated region
        $region25: #{tpu_custom_call.1} parent=11 // pred_check
          %p226 = pneg %p141
        $region26: #{tpu_custom_call.1} parent=11 // pred_check_branch
          %228 = sbr.rel (%p226) target = $region28
        $region27: #{tpu_custom_call.1} parent=11 // pred_region
          _
        $region28: #{tpu_custom_call.1} parent=11 // pred_fallthru
          _
      $region12: #{tpu_custom_call.1} parent=5 // pred_fallthru
        _
      %p229 = scmp.lt.s32.totalorder %s19, 2
      // Predicated region
      $region29: #{tpu_custom_call.1} parent=5 // pred_check
        %p230 = pneg %p229
      $region30: #{tpu_custom_call.1} parent=5 // pred_check_branch
        %232 = sbr.rel (%p230) target = $region32
      $region31: #{tpu_custom_call.1} parent=5 // pred_region
        // Predicated region
        $region33: #{tpu_custom_call.1} parent=31 // pred_check
          %p233 = pneg %p51
        $region34: #{tpu_custom_call.1} parent=31 // pred_check_branch
          %235 = sbr.rel (%p233) target = $region36
        $region35: #{tpu_custom_call.1} parent=31 // pred_region
          %s236 = sand.u32 %s41, 1
          %s237 = scalar_lea.sflag [#allocation6], %s236
          %s238 = sand.u32 %s41, 1
          %s239 = smul.addr %s238, 16
          %s240 = scalar_lea.vmem [#allocation5], %s239
          %242 = vsyncadd %s237, 0
          %s243 = smul.addr %s26, 2
          %s244 = smul.addr %s243, 8
          %s245 = scalar_lea.hbm %s0, %s244
          %s246 = sshll.u32 %s245, 4
          %s247 = int_to_ptr.hbm [resolvable:$true] %s246
          %s248 = sshll.u32 %s240, 4
          %s249 = int_to_ptr.vmem [resolvable:$true] %s248
          %254 = dma.hbm_to_vmem [thread:$0]  %s247, 256, %s249, %s237, 128, 128, 8
        $region36: #{tpu_custom_call.1} parent=31 // pred_fallthru
          _
      $region32: #{tpu_custom_call.1} parent=5 // pred_fallthru
        _
      %p255 = scmp.le.s32.totalorder 1, %s19
      %p256 = scmp.lt.s32.totalorder %s19, 3
      %p257 = pnand %p255, %p256
      %p258 = pneg %p257
      // Predicated region
      $region37: #{tpu_custom_call.1} parent=5 // pred_check
        _
      $region38: #{tpu_custom_call.1} parent=5 // pred_check_branch
        %260 = sbr.rel (%p257) target = $region40
      $region39: #{tpu_custom_call.1} parent=5 // pred_region
        %s261 = ssub.s32 %s19, 1
        %s262 = sand.u32 %s44, 1
        %s263 = scalar_lea.sflag [#allocation6], %s262
        %s264 = sand.u32 %s44, 1
        %s265 = smul.addr %s264, 16
        %s266 = scalar_lea.vmem [#allocation5], %s265
        // Predicated region
        $region41: #{tpu_custom_call.1} parent=39 // pred_check
          %p267 = pneg %p57
        $region42: #{tpu_custom_call.1} parent=39 // pred_check_branch
          %269 = sbr.rel (%p267) target = $region44
        $region43: #{tpu_custom_call.1} parent=39 // pred_region
          %271 = dma.done %s263, 256
        $region44: #{tpu_custom_call.1} parent=39 // pred_fallthru
          _
        // Predicated region
        $region45: #{tpu_custom_call.1} parent=39 // pred_check
          %p272 = pneg %p78
        $region46: #{tpu_custom_call.1} parent=39 // pred_check_branch
          %274 = sbr.rel (%p272) target = $region48
        $region47: #{tpu_custom_call.1} parent=39 // pred_region
          %276 = dma.done [#allocation9], 512
        $region48: #{tpu_custom_call.1} parent=39 // pred_fallthru
          _
        // Predicated region
        $region49: #{tpu_custom_call.1} parent=39 // pred_check
          %p277 = pneg %p99
        $region50: #{tpu_custom_call.1} parent=39 // pred_check_branch
          %279 = sbr.rel (%p277) target = $region52
        $region51: #{tpu_custom_call.1} parent=39 // pred_region
          %281 = dma.done [#allocation9], 512
        $region52: #{tpu_custom_call.1} parent=39 // pred_fallthru
          _
        // Predicated region
        $region53: #{tpu_custom_call.1} parent=39 // pred_check
          %p282 = pneg %p120
        $region54: #{tpu_custom_call.1} parent=39 // pred_check_branch
          %284 = sbr.rel (%p282) target = $region56
        $region55: #{tpu_custom_call.1} parent=39 // pred_region
          %286 = dma.done [#allocation12], 512
        $region56: #{tpu_custom_call.1} parent=39 // pred_fallthru
          _
        %s287 = sand.u32 %s44, 1
        %s288 = scalar_lea.sflag [#allocation6], %s287
        %s289 = sand.u32 %s44, 1
        %s290 = smul.addr %s289, 16
        %s291 = scalar_lea.vmem [#allocation5], %s290
        %p292 = pneg %p57
        %p293 = pneg %p54
        %p294 = pneg %p78
        %p295 = pneg %p75
        %p296 = pneg %p99
        %p297 = pneg %p96
        %p298 = pneg %p120
        %p299 = pneg %p117
        %p300 = pneg %p141
        %p301 = pneg %p138
        %p302 = pneg %p169
        %p303 = pneg %p166
        %s304 = sand.u32 %s156, 1
        %s305 = scalar_lea.sflag [#allocation7], %s304
        %s306 = sand.u32 %s156, 1
        %s307 = smul.addr %s306, 16
        %s308 = scalar_lea.vmem [#allocation13], %s307
        %s309 = smul.u32 2, %s29
        %s310 = smul.u32 %s29, 16
        %v311 = vld [vmem:[%s266] sm:$0xff]
        %v312 = vld [vmem:[%s266 + $0x8] sm:$0xff]
        %v313 = vld [vmem:[#allocation10] sm:$0xff]
        %v314 = vld [vmem:[#allocation10 + $0x8] sm:$0xff]
        %v315 = vld [vmem:[#allocation10 + $0x10] sm:$0xff]
        %v316 = vld [vmem:[#allocation10 + $0x18] sm:$0xff]
        %vm317 = vcmask 261120
        %v319 = vsel %vm317, %v311, 0
        %v322 = vsel %vm317, %v312, 0
        %324 = vmatpush.msra.mxu0 0.0
        %325 = vmatpush.msra.mxu0 0.0
        %326 = vmatpush.msra.mxu0 0.0
        %327 = vmatpush.msra.mxu0 0.0
        %328 = vmatpush.msra.mxu0 0.0
        %329 = vmatpush.msra.mxu0 0.0
        %330 = vmatpush.msra.mxu0 0.0
        %331 = vmatpush.msra.mxu0 0.0
        %332 = vmatpush.msra.mxu0 0.0
        %333 = vmatpush.msra.mxu0 0.0
        %334 = vmatpush.msra.mxu0 0.0
        %335 = vmatpush.msra.mxu0 0.0
        %336 = vmatpush.msra.mxu0 %v316
        %337 = vmatpush.msra.mxu0 %v315
        %338 = vmatpush.msra.mxu0 %v314
        %339 = vmatpush.msra.mxu0 %v313
        %340 = vmatmul.f32.gmra.mxu0 %v319
        %v341 = vpop.f32.mrf.mxu0
        %v342 = vadd.f32 0.0, %v341
        %343 = vmatmul.f32.gmra.mxu0 %v322
        %v344 = vpop.f32.mrf.mxu0
        %v345 = vadd.f32 0.0, %v344
        %346 = vdwg.mxu0
        %vm347 = vcmask 523264
        %348 = vst.msk [vmem:[#allocation3] sm:$0xff] %vm347, %v342
        %349 = vst.msk [vmem:[#allocation3 + $0x8] sm:$0xff] %vm347, %v345
        %s350 = scalar_lea.vmem %s266, %s310 [#allocation5]
        %v351 = vld [vmem:[%s350] sm:$0xff]
        %v352 = vld [vmem:[%s350 + $0x8] sm:$0xff]
        %v353 = vld [vmem:[#allocation8] sm:$0xff]
        %v354 = vld [vmem:[#allocation8 + $0x8] sm:$0xff]
        %v355 = vld [vmem:[#allocation8 + $0x10] sm:$0xff]
        %v356 = vld [vmem:[#allocation8 + $0x18] sm:$0xff]
        %v358 = vsel %vm317, %v351, 0
        %v361 = vsel %vm317, %v352, 0
        %363 = vmatpush.msra.mxu0 0.0
        %364 = vmatpush.msra.mxu0 0.0
        %365 = vmatpush.msra.mxu0 0.0
        %366 = vmatpush.msra.mxu0 0.0
        %367 = vmatpush.msra.mxu0 0.0
        %368 = vmatpush.msra.mxu0 0.0
        %369 = vmatpush.msra.mxu0 0.0
        %370 = vmatpush.msra.mxu0 0.0
        %371 = vmatpush.msra.mxu0 0.0
        %372 = vmatpush.msra.mxu0 0.0
        %373 = vmatpush.msra.mxu0 0.0
        %374 = vmatpush.msra.mxu0 0.0
        %375 = vmatpush.msra.mxu0 %v356
        %376 = vmatpush.msra.mxu0 %v355
        %377 = vmatpush.msra.mxu0 %v354
        %378 = vmatpush.msra.mxu0 %v353
        %379 = vmatmul.f32.gmra.mxu0 %v358
        %v380 = vpop.f32.mrf.mxu0
        %v381 = vadd.f32 0.0, %v380
        %382 = vmatmul.f32.gmra.mxu0 %v361
        %v383 = vpop.f32.mrf.mxu0
        %v384 = vadd.f32 0.0, %v383
        %385 = vdwg.mxu0
        %386 = vst.msk [vmem:[#allocation2] sm:$0xff] %vm317, %v381
        %387 = vst.msk [vmem:[#allocation2 + $0x8] sm:$0xff] %vm317, %v384
        %v388 = vld [vmem:[#allocation2] sm:$0xff]
        %v389 = vld [vmem:[#allocation2 + $0x8] sm:$0xff]
        %v390 = vld [vmem:[#allocation3] sm:$0xff]
        %v391 = vld [vmem:[#allocation3 + $0x8] sm:$0xff]
        %vm392 = vcmask 130048
        %v394 = vsel %vm392, %v388, 0
        %v397 = vsel %vm392, %v389, 0
        %v400 = vsel %vm392, %v390, 0
        %v403 = vsel %vm392, %v391, 0
        %405 = vmatpush.xpose.msra.mxu0 0.0
        %406 = vmatpush.xpose.msra.mxu0 0.0
        %407 = vmatpush.xpose.msra.mxu0 0.0
        %408 = vmatpush.xpose.msra.mxu0 0.0
        %409 = vmatpush.xpose.msra.mxu0 0.0
        %410 = vmatpush.xpose.msra.mxu0 0.0
        %411 = vmatpush.xpose.msra.mxu0 0.0
        %412 = vmatpush.xpose.msra.mxu0 0.0
        %413 = vmatpush.xpose.msra.mxu0 0.0
        %414 = vmatpush.xpose.msra.mxu0 0.0
        %415 = vmatpush.xpose.msra.mxu0 0.0
        %416 = vmatpush.xpose.msra.mxu0 0.0
        %417 = vmatpush.xpose.msra.mxu0 0.0
        %418 = vmatpush.xpose.msra.mxu0 0.0
        %419 = vmatpush.xpose.msra.mxu0 %v403
        %420 = vmatpush.xpose.msra.mxu0 %v400
        %421 = vmatmul.f32.gmra.mxu0 %v394
        %v422 = vpop.f32.mrf.mxu0
        %v423 = vadd.f32 0.0, %v422
        %424 = vmatmul.f32.gmra.mxu0 %v397
        %v425 = vpop.f32.mrf.mxu0
        %v426 = vadd.f32 0.0, %v425
        %427 = vdwg.mxu0
        %v428 = vsel %vm392, %v423, -inf
        %429 = vmax.xlane.f32.xlu0 %v428
        %v430 = vpop.xlane.xlu0 %429
        %v431 = vsel %vm392, %v426, -inf
        %432 = vmax.xlane.f32.xlu0 %v431
        %v433 = vpop.xlane.xlu0 %432
        %v434 = vsub.f32 %v423, %v430
        %v435 = vsub.f32 %v426, %v433
        %v436 = vmul.f32 %v434, 1.442695
        %v437 = vpow.pop %v436
        %v438 = vmul.f32 %v435, 1.442695
        %v439 = vpow.pop %v438
        %v440 = vsel %vm392, %v437, 0.0
        %441 = vadd.xlane.f32.xlu0 %v440
        %v442 = vpop.xlane.xlu0 %441
        %v443 = vsel %vm392, %v439, 0.0
        %444 = vadd.xlane.f32.xlu0 %v443
        %v445 = vpop.xlane.xlu0 %444
        %v446 = vrcp.pop %v442
        %v447 = vmul.f32 %v442, %v446
        %v448 = vsub.f32 1.0, %v447
        %v449 = vmul.f32 %v446, %v448
        %v450 = vadd.f32 %v446, %v449
        %vm451 = vweird.f32 %v442
        %vm452 = vweird.f32 %v446
        %vm453 = vmor %vm451, %vm452
        %v454 = vsel %vm453, %v446, %v450
        %v455 = vand.u32 2147483647, %v442
        %vm456 = vcmp.eq.f32.partialorder %v455, 8.507059e+37
        %v457 = vand.u32 %v442, 2147483648
        %v458 = vor.u32 1.1754944e-38, %v457
        %v459 = vsel %vm456, %v458, %v454
        %v460 = vrcp.pop %v445
        %v461 = vmul.f32 %v445, %v460
        %v462 = vsub.f32 1.0, %v461
        %v463 = vmul.f32 %v460, %v462
        %v464 = vadd.f32 %v460, %v463
        %vm465 = vweird.f32 %v445
        %vm466 = vweird.f32 %v460
        %vm467 = vmor %vm465, %vm466
        %v468 = vsel %vm467, %v460, %v464
        %v469 = vand.u32 2147483647, %v445
        %vm470 = vcmp.eq.f32.partialorder %v469, 8.507059e+37
        %v471 = vand.u32 %v445, 2147483648
        %v472 = vor.u32 1.1754944e-38, %v471
        %v473 = vsel %vm470, %v472, %v468
        %v474 = vmul.f32 %v437, %v459
        %v475 = vmul.f32 %v439, %v473
        %476 = vrot.lane.b32.xlu0 %v390, 96
        %v477 = vpop.permute.xlu0 %476
        %478 = vrot.lane.b32.xlu0 %v391, 96
        %v479 = vpop.permute.xlu0 %478
        %v483 = vsel %vm392, %v474, 0
        %v486 = vsel %vm392, %v475, 0
        %488 = vmatpush.msra.mxu0 0.0
        %489 = vmatpush.msra.mxu0 0.0
        %490 = vmatpush.msra.mxu0 0.0
        %491 = vmatpush.msra.mxu0 0.0
        %492 = vmatpush.msra.mxu0 0.0
        %493 = vmatpush.msra.mxu0 0.0
        %494 = vmatpush.msra.mxu0 0.0
        %495 = vmatpush.msra.mxu0 0.0
        %496 = vmatpush.msra.mxu0 0.0
        %497 = vmatpush.msra.mxu0 0.0
        %498 = vmatpush.msra.mxu0 0.0
        %499 = vmatpush.msra.mxu0 0.0
        %500 = vmatpush.msra.mxu0 0.0
        %501 = vmatpush.msra.mxu0 0.0
        %502 = vmatpush.msra.mxu0 %v479
        %503 = vmatpush.msra.mxu0 %v477
        %504 = vmatmul.f32.gmra.mxu0 %v483
        %v505 = vpop.f32.mrf.mxu0
        %v506 = vadd.f32 0.0, %v505
        %507 = vmatmul.f32.gmra.mxu0 %v486
        %v508 = vpop.f32.mrf.mxu0
        %v509 = vadd.f32 0.0, %v508
        %510 = vdwg.mxu0
        %511 = vst.msk [vmem:[#allocation4] sm:$0xff] %vm392, %v506
        %512 = vst.msk [vmem:[#allocation4 + $0x8] sm:$0xff] %vm392, %v509
        %v513 = vld [vmem:[#allocation2] sm:$0xff]
        %v514 = vld [vmem:[#allocation2 + $0x8] sm:$0xff]
        %v515 = vld [vmem:[#allocation3] sm:$0xff]
        %v516 = vld [vmem:[#allocation3 + $0x8] sm:$0xff]
        %519 = vrot.lane.b32.xlu0 %v513, 112
        %v520 = vpop.permute.xlu0 %519
        %521 = vrot.lane.b32.xlu0 %v514, 112
        %v522 = vpop.permute.xlu0 %521
        %525 = vrot.lane.b32.xlu0 %v515, 112
        %v526 = vpop.permute.xlu0 %525
        %527 = vrot.lane.b32.xlu0 %v516, 112
        %v528 = vpop.permute.xlu0 %527
        %v529 = vsel %vm392, %v520, 0
        %v531 = vsel %vm392, %v522, 0
        %v533 = vsel %vm392, %v526, 0
        %v535 = vsel %vm392, %v528, 0
        %537 = vmatpush.xpose.msra.mxu0 0.0
        %538 = vmatpush.xpose.msra.mxu0 0.0
        %539 = vmatpush.xpose.msra.mxu0 0.0
        %540 = vmatpush.xpose.msra.mxu0 0.0
        %541 = vmatpush.xpose.msra.mxu0 0.0
        %542 = vmatpush.xpose.msra.mxu0 0.0
        %543 = vmatpush.xpose.msra.mxu0 0.0
        %544 = vmatpush.xpose.msra.mxu0 0.0
        %545 = vmatpush.xpose.msra.mxu0 0.0
        %546 = vmatpush.xpose.msra.mxu0 0.0
        %547 = vmatpush.xpose.msra.mxu0 0.0
        %548 = vmatpush.xpose.msra.mxu0 0.0
        %549 = vmatpush.xpose.msra.mxu0 0.0
        %550 = vmatpush.xpose.msra.mxu0 0.0
        %551 = vmatpush.xpose.msra.mxu0 %v535
        %552 = vmatpush.xpose.msra.mxu0 %v533
        %553 = vmatmul.f32.gmra.mxu0 %v529
        %v554 = vpop.f32.mrf.mxu0
        %v555 = vadd.f32 0.0, %v554
        %556 = vmatmul.f32.gmra.mxu0 %v531
        %v557 = vpop.f32.mrf.mxu0
        %v558 = vadd.f32 0.0, %v557
        %559 = vdwg.mxu0
        %v560 = vsel %vm392, %v555, -inf
        %561 = vmax.xlane.f32.xlu0 %v560
        %v562 = vpop.xlane.xlu0 %561
        %v563 = vsel %vm392, %v558, -inf
        %564 = vmax.xlane.f32.xlu0 %v563
        %v565 = vpop.xlane.xlu0 %564
        %v566 = vsub.f32 %v555, %v562
        %v567 = vsub.f32 %v558, %v565
        %v568 = vmul.f32 %v566, 1.442695
        %v569 = vpow.pop %v568
        %v570 = vmul.f32 %v567, 1.442695
        %v571 = vpow.pop %v570
        %v572 = vsel %vm392, %v569, 0.0
        %573 = vadd.xlane.f32.xlu0 %v572
        %v574 = vpop.xlane.xlu0 %573
        %v575 = vsel %vm392, %v571, 0.0
        %576 = vadd.xlane.f32.xlu0 %v575
        %v577 = vpop.xlane.xlu0 %576
        %v578 = vrcp.pop %v574
        %v579 = vmul.f32 %v574, %v578
        %v580 = vsub.f32 1.0, %v579
        %v581 = vmul.f32 %v578, %v580
        %v582 = vadd.f32 %v578, %v581
        %vm583 = vweird.f32 %v574
        %vm584 = vweird.f32 %v578
        %vm585 = vmor %vm583, %vm584
        %v586 = vsel %vm585, %v578, %v582
        %v587 = vand.u32 2147483647, %v574
        %vm588 = vcmp.eq.f32.partialorder %v587, 8.507059e+37
        %v589 = vand.u32 %v574, 2147483648
        %v590 = vor.u32 1.1754944e-38, %v589
        %v591 = vsel %vm588, %v590, %v586
        %v592 = vrcp.pop %v577
        %v593 = vmul.f32 %v577, %v592
        %v594 = vsub.f32 1.0, %v593
        %v595 = vmul.f32 %v592, %v594
        %v596 = vadd.f32 %v592, %v595
        %vm597 = vweird.f32 %v577
        %vm598 = vweird.f32 %v592
        %vm599 = vmor %vm597, %vm598
        %v600 = vsel %vm599, %v592, %v596
        %v601 = vand.u32 2147483647, %v577
        %vm602 = vcmp.eq.f32.partialorder %v601, 8.507059e+37
        %v603 = vand.u32 %v577, 2147483648
        %v604 = vor.u32 1.1754944e-38, %v603
        %v605 = vsel %vm602, %v604, %v600
        %v606 = vmul.f32 %v569, %v591
        %v607 = vmul.f32 %v571, %v605
        %608 = vrot.lane.b32.xlu0 %v515, 80
        %v609 = vpop.permute.xlu0 %608
        %610 = vrot.lane.b32.xlu0 %v516, 80
        %v611 = vpop.permute.xlu0 %610
        %v615 = vsel %vm392, %v606, 0
        %v618 = vsel %vm392, %v607, 0
        %620 = vmatpush.msra.mxu0 0.0
        %621 = vmatpush.msra.mxu0 0.0
        %622 = vmatpush.msra.mxu0 0.0
        %623 = vmatpush.msra.mxu0 0.0
        %624 = vmatpush.msra.mxu0 0.0
        %625 = vmatpush.msra.mxu0 0.0
        %626 = vmatpush.msra.mxu0 0.0
        %627 = vmatpush.msra.mxu0 0.0
        %628 = vmatpush.msra.mxu0 0.0
        %629 = vmatpush.msra.mxu0 0.0
        %630 = vmatpush.msra.mxu0 0.0
        %631 = vmatpush.msra.mxu0 0.0
        %632 = vmatpush.msra.mxu0 0.0
        %633 = vmatpush.msra.mxu0 0.0
        %634 = vmatpush.msra.mxu0 %v611
        %635 = vmatpush.msra.mxu0 %v609
        %636 = vmatmul.f32.gmra.mxu0 %v615
        %v637 = vpop.f32.mrf.mxu0
        %v638 = vadd.f32 0.0, %v637
        %639 = vmatmul.f32.gmra.mxu0 %v618
        %v640 = vpop.f32.mrf.mxu0
        %v641 = vadd.f32 0.0, %v640
        %642 = vdwg.mxu0
        %645 = vrot.lane.b32.xlu0 %v638, 16
        %v646 = vpop.permute.xlu0 %645
        %647 = vrot.lane.b32.xlu0 %v641, 16
        %v648 = vpop.permute.xlu0 %647
        %vm651 = vcmask 261248
        %652 = vst.msk [vmem:[#allocation4] sm:$0xff] %vm651, %v646
        %653 = vst.msk [vmem:[#allocation4 + $0x8] sm:$0xff] %vm651, %v648
        %v654 = vld [vmem:[#allocation4] sm:$0xff]
        %v655 = vld [vmem:[#allocation4 + $0x8] sm:$0xff]
        %v656 = vld [vmem:[#allocation11] sm:$0xff]
        %v657 = vld [vmem:[#allocation11 + $0x8] sm:$0xff]
        %v658 = vld [vmem:[#allocation11 + $0x10] sm:$0xff]
        %v659 = vld [vmem:[#allocation11 + $0x18] sm:$0xff]
        %v660 = vld [vmem:[%s4] sm:$0x1]
        %v662 = vperm.slane %v660, 0
        %v665 = vsel %vm317, %v654, 0
        %v668 = vsel %vm317, %v655, 0
        %670 = vmatpush.msra.mxu0 0.0
        %671 = vmatpush.msra.mxu0 0.0
        %672 = vmatpush.msra.mxu0 0.0
        %673 = vmatpush.msra.mxu0 0.0
        %674 = vmatpush.msra.mxu0 0.0
        %675 = vmatpush.msra.mxu0 0.0
        %676 = vmatpush.msra.mxu0 0.0
        %677 = vmatpush.msra.mxu0 0.0
        %678 = vmatpush.msra.mxu0 0.0
        %679 = vmatpush.msra.mxu0 0.0
        %680 = vmatpush.msra.mxu0 0.0
        %681 = vmatpush.msra.mxu0 0.0
        %682 = vmatpush.msra.mxu0 %v659
        %683 = vmatpush.msra.mxu0 %v658
        %684 = vmatpush.msra.mxu0 %v657
        %685 = vmatpush.msra.mxu0 %v656
        %686 = vmatmul.f32.gmra.mxu0 %v665
        %v687 = vpop.f32.mrf.mxu0
        %v688 = vadd.f32 %v662, %v687
        %689 = vmatmul.f32.gmra.mxu0 %v668
        %v690 = vpop.f32.mrf.mxu0
        %v691 = vadd.f32 %v662, %v690
        %692 = vdwg.mxu0
        %693 = vst [vmem:[%s308] sm:$0xff] %v688
        %694 = vst [vmem:[%s308 + $0x8] sm:$0xff] %v691
        %s695 = sand.u32 %s156, 1
        %s696 = scalar_lea.sflag [#allocation7], %s695
        %s697 = sand.u32 %s156, 1
        %s698 = smul.addr %s697, 16
        %s699 = scalar_lea.vmem [#allocation13], %s698
        // Predicated region
        $region57: #{tpu_custom_call.1} parent=39 // pred_check
          %p700 = pneg %p166
        $region58: #{tpu_custom_call.1} parent=39 // pred_check_branch
          %702 = sbr.rel (%p700) target = $region60
        $region59: #{tpu_custom_call.1} parent=39 // pred_region
          %s703 = smul.u32 2, %s29
          %705 = vsyncadd %s696, 0
          %s706 = smul.addr %s28, 2
          %s707 = sadd.s32 %s703, %s706
          %s708 = smul.addr %s707, 8
          %s709 = scalar_lea.hbm %s5, %s708
          %s710 = sshll.u32 %s699, 4
          %s711 = int_to_ptr.vmem [resolvable:$true] %s710
          %s712 = sshll.u32 %s709, 4
          %s713 = int_to_ptr.hbm [resolvable:$true] %s712
          %718 = dma.vmem_to_hbm [thread:$0]  %s711, 256, %s713, %s696, 128, 128, 8
        $region60: #{tpu_custom_call.1} parent=39 // pred_fallthru
          _
      $region40: #{tpu_custom_call.1} parent=5 // pred_fallthru
        _
      %p719 = scmp.le.s32.totalorder 2, %s19
      // Predicated region
      $region61: #{tpu_custom_call.1} parent=5 // pred_check
        %p720 = pneg %p719
      $region62: #{tpu_custom_call.1} parent=5 // pred_check_branch
        %722 = sbr.rel (%p720) target = $region64
      $region63: #{tpu_custom_call.1} parent=5 // pred_region
        %s723 = ssub.s32 %s19, 2
        // Predicated region
        $region65: #{tpu_custom_call.1} parent=63 // pred_check
          %p724 = pneg %p172
        $region66: #{tpu_custom_call.1} parent=63 // pred_check_branch
          %726 = sbr.rel (%p724) target = $region68
        $region67: #{tpu_custom_call.1} parent=63 // pred_region
          %s727 = sand.u32 %s157, 1
          %s728 = scalar_lea.sflag [#allocation7], %s727
          %s729 = sand.u32 %s157, 1
          %s730 = smul.addr %s729, 16
          %s731 = scalar_lea.vmem [#allocation13], %s730
          %733 = dma.done %s728, 256
        $region68: #{tpu_custom_call.1} parent=63 // pred_fallthru
          _
      $region64: #{tpu_custom_call.1} parent=5 // pred_fallthru
        _
    $region6: #{tpu_custom_call.1} parent=1 // loop_footer
      %s23 = sadd.s32 1, %s19
    $region7: #{tpu_custom_call.1} parent=1 // loop_footer_branch
      %18 = sbr.rel target = $region3
    $region8: #{tpu_custom_call.1} parent=1 // loop_exit
      _
    %734 = vsyncpa [#allocation6], 1
    %s735 = scalar_lea.sflag [#allocation6], 1
    %736 = vsyncpa %s735, 1
    %737 = vsyncpa [#allocation9], 1
    %738 = vsyncpa [#allocation12], 1
    %739 = vsyncpa [#allocation7], 1
    %s740 = scalar_lea.sflag [#allocation7], 1
    %741 = vsyncpa %s740, 1

</llo_original>
